<compile_context>
chip_gen: v7x
topology: tpu7x:2x2x1
jax: 0.10.0
libtpu: 0.0.40
codegen_flags: <defaults>
</compile_context>

<pallas_src>
import jax
import jax.numpy as jnp
from jax import lax
from jax.experimental import pallas as pl
from jax.experimental.pallas import tpu as pltpu

SQRT_HALF = 0.7071067811865476


def _gelu_exact(x):
    # Matches torch.nn.functional.gelu default ("exact", erf-based) form.
    return 0.5 * x * (1.0 + jax.scipy.special.erf(x * SQRT_HALF))


def _vmem_capacity_bytes(default=64 * 1024 * 1024):
    """Physical VMEM per TensorCore; conservative 64 MiB if the query fails."""
    try:
        info = pltpu.get_tpu_info()
    except Exception:
        return default
    for name in ("vmem_capacity_bytes", "vmem_size_bytes", "vmem_bytes"):
        cap = getattr(info, name, None)
        if cap:
            return int(cap)
    return default


def _choose_tile_h(B, H, Wp, Cin, C2, budget_bytes):
    """Largest row tile (any divisor of H) whose working set fits the budget.

    Keeps at least 2 grid steps when B == 1 so v7x's second TensorCore is not
    left idle.
    """
    hidden = C2 // 2
    best = 1
    for th in range(1, min(H, 512) + 1):
        if H % th:
            continue
        if B == 1 and H > 1 and H // th < 2:
            continue
        # Double-buffered I/O blocks (mid tile + 2 halo rows + output tile).
        io = 2 * (th * Wp * Cin + 2 * Wp * Cin + th * Wp * Cin) * 4
        # Live f32 activations: y, y_left, y_right, acc, gating temps, out.
        act = ((3 * (th + 2) + th) * Wp * C2
               + 2 * th * Wp * hidden + th * Wp * Cin) * 4
        # Weights/biases (double buffered).
        wts = 2 * (Cin * C2 * 2 + hidden * Cin * 2 + (11 * C2 + Cin) * 4)
        if int(1.3 * (io + act)) + wts <= budget_bytes:
            best = th
    return best


def _effn_kernel(tile_h, w_valid, use_roll):
    TH = tile_h

    def kernel(x_mid_ref, x_top_ref, x_bot_ref,
               w_in_ref, b_in_ref, w_dw_ref, b_dw_ref, w_out_ref, b_out_ref,
               o_ref):
        # x_mid_ref: (1, TH, Wp, Cin)  interior rows of this tile
        # x_top_ref: (1, 1,  Wp, Cin)  row just above the tile (clamped)
        # x_bot_ref: (1, 1,  Wp, Cin)  row just below the tile (clamped)
        # w_in_ref : (Cin, 2*hidden) bf16     b_in_ref : (1, 2*hidden) f32
        # w_dw_ref : (3, 3, 2*hidden) f32     b_dw_ref : (1, 2*hidden) f32
        # w_out_ref: (hidden, Cin)   bf16     b_out_ref: (1, Cin)      f32
        _, _, Wp, Cin = x_mid_ref.shape
        C2 = w_in_ref.shape[1]
        hidden = C2 // 2

        j = pl.program_id(1)
        nj = pl.num_programs(1)
        top_in = (j > 0).astype(jnp.float32)        # 0.0 when the top halo row
        bot_in = (j < nj - 1).astype(jnp.float32)   # / bottom halo row is OOB

        # ---- project_in: ONE MXU matmul over tile + halo rows ----------------
        # Out-of-image halo rows are zeroed on the (cheap) Cin-wide side; their
        # bias contribution is zeroed via `bscale`, so y == 0 there exactly,
        # matching the depthwise conv's 'same' zero padding.
        x_top = x_top_ref[0, 0] * top_in                                # (Wp, Cin)
        x_bot = x_bot_ref[0, 0] * bot_in                                # (Wp, Cin)
        x_all = jnp.concatenate([x_top[None], x_mid_ref[0], x_bot[None]],
                                axis=0)                                 # (TH+2, Wp, Cin)
        y = jnp.dot(x_all.reshape((TH + 2) * Wp, Cin).astype(jnp.bfloat16),
                    w_in_ref[...],
                    preferred_element_type=jnp.float32).reshape(TH + 2, Wp, C2)
        bscale = jnp.concatenate(
            [jnp.broadcast_to(top_in, (1, 1, 1)),
             jnp.ones((TH, 1, 1), jnp.float32),
             jnp.broadcast_to(bot_in, (1, 1, 1))], axis=0)              # (TH+2,1,1)
        y = y + b_in_ref[...] * bscale

        need_col = use_roll or (w_valid < Wp)
        col = (lax.broadcasted_iota(jnp.int32, (1, Wp, 1), 1)
               if need_col else None)
        if w_valid < Wp:
            # Zero right-pad columns -> they act as 'same' zero padding.
            y = jnp.where(col < w_valid, y, 0.0)

        # ---- depthwise 3x3, stride 1, 'same' ---------------------------------
        acc = jnp.broadcast_to(b_dw_ref[0], (TH, Wp, C2)).astype(jnp.float32)
        if use_roll:
            # kx taps via XLU roll (no misaligned sublane slices).
            y_lft = pltpu.roll(y, 1, axis=1)        # [., w] <- y[., w-1]
            y_rgt = pltpu.roll(y, Wp - 1, axis=1)   # [., w] <- y[., w+1 (mod Wp)]
            if w_valid == Wp:
                # No pad columns: mask the wrapped edge column to zero.
                y_lft = jnp.where(col == 0, 0.0, y_lft)
                y_rgt = jnp.where(col == Wp - 1, 0.0, y_rgt)
            taps = (y_lft, y, y_rgt)                # indexed by kx = 0, 1, 2
            for ky in range(3):
                for kx in range(3):
                    acc = acc + taps[kx][ky:ky + TH] * w_dw_ref[ky, kx, :]
        else:
            # Fallback: zero-column pad + slices (proven path; slower).
            zcol = jnp.zeros((TH + 2, 1, C2), jnp.float32)
            yp = jnp.concatenate([zcol, y, zcol], axis=1)               # (TH+2,Wp+2,C2)
            for ky in range(3):
                for kx in range(3):
                    acc = acc + yp[ky:ky + TH, kx:kx + Wp, :] * w_dw_ref[ky, kx, :]

        # ---- gated GELU (exact erf -> torch parity) ---------------------------
        g = _gelu_exact(acc[..., :hidden]) * acc[..., hidden:]          # (TH,Wp,hid)

        # ---- project_out (MXU, bf16 operands, f32 acc) ------------------------
        out = jnp.dot(g.reshape(TH * Wp, hidden).astype(jnp.bfloat16),
                      w_out_ref[...],
                      preferred_element_type=jnp.float32) + b_out_ref[...]
        o_ref[0] = out.reshape(TH, Wp, Cin).astype(o_ref.dtype)

    return kernel


def effn_forward_nhwc(x_nhwc, params, *, tile_h=None, kx_taps="roll"):
    """x_nhwc: (B, H, W, Cin) float32 -> (B, H, W, Cin) float32."""
    w_in, b_in, w_dw, b_dw, w_out, b_out = params
    B, H, W, Cin = x_nhwc.shape
    C2 = w_in.shape[1]

    # Pad W to a multiple of 8 (sublane) so in-kernel reshapes stay layout-free.
    Wp = (W + 7) // 8 * 8
    if Wp != W:
        x_nhwc = jnp.pad(x_nhwc, ((0, 0), (0, 0), (0, Wp - W), (0, 0)))

    # Generation-aware VMEM sizing: ~96 MiB limit on 128 MiB parts (v5e/v6e),
    # ~38 MiB on v7x (64 MiB/TC).
    cap = _vmem_capacity_bytes()
    vmem_limit = int(max(cap * 0.6, cap - 32 * 1024 * 1024))

    if tile_h is None:
        tile_h = _choose_tile_h(B, H, Wp, Cin, C2,
                                budget_bytes=int(vmem_limit * 0.6))
    TH = tile_h
    assert H % TH == 0, (H, TH)
    NJ = H // TH

    # 1x1-conv weights in bf16 (MXU native rate); biases / dw weights stay f32.
    w_in_bf = w_in.astype(jnp.bfloat16)
    w_out_bf = w_out.astype(jnp.bfloat16)

    mid_spec = pl.BlockSpec((1, TH, Wp, Cin), lambda b, j: (b, j, 0, 0))
    top_spec = pl.BlockSpec(
        (1, 1, Wp, Cin), lambda b, j: (b, jnp.maximum(j * TH - 1, 0), 0, 0))
    bot_spec = pl.BlockSpec(
        (1, 1, Wp, Cin), lambda b, j: (b, jnp.minimum(j * TH + TH, H - 1), 0, 0))

    def full(shape):
        return pl.BlockSpec(shape, lambda b, j, _s=len(shape): (0,) * _s)

    out = pl.pallas_call(
        _effn_kernel(TH, W, kx_taps == "roll"),
        out_shape=jax.ShapeDtypeStruct((B, H, Wp, Cin), x_nhwc.dtype),
        grid_spec=pltpu.PrefetchScalarGridSpec(
            num_scalar_prefetch=0,
            grid=(B, NJ),
            in_specs=[
                mid_spec, top_spec, bot_spec,
                full(w_in_bf.shape), full(b_in.shape),
                full(w_dw.shape), full(b_dw.shape),
                full(w_out_bf.shape), full(b_out.shape),
            ],
            out_specs=pl.BlockSpec((1, TH, Wp, Cin), lambda b, j: (b, j, 0, 0)),
        ),
        compiler_params=pltpu.CompilerParams(
            dimension_semantics=("parallel", "parallel"),
            vmem_limit_bytes=vmem_limit),
    )(x_nhwc, x_nhwc, x_nhwc, w_in_bf, b_in, w_dw, b_dw, w_out_bf, b_out)

    if Wp != W:
        out = out[:, :, :W, :]
    return out


def effn_forward(x_nchw, params, *, tile_h=None, kx_taps="roll"):
    """PyTorch-layout adapter: (B, Cin, H, W) -> (B, Cin, H, W)."""
    x_nhwc = jnp.transpose(x_nchw, (0, 2, 3, 1))
    out = effn_forward_nhwc(x_nhwc, params, tile_h=tile_h, kx_taps=kx_taps)
    return jnp.transpose(out, (0, 3, 1, 2))


def init_params(key, in_channels, ffn_expansion_factor=2.0):
    """Deterministic synthetic parameters (shapes follow EFFN.__init__)."""
    hidden = int(in_channels * ffn_expansion_factor)
    C2 = 2 * hidden
    ks = jax.random.split(key, 6)
    s = 0.1
    # 1x1 conv weights stored as (in, out) matmul matrices; biases as (1, out).
    w_in = jax.random.normal(ks[0], (in_channels, C2), jnp.float32) * s
    b_in = jax.random.normal(ks[1], (1, C2), jnp.float32) * s
    # Depthwise 3x3 weights stored HWC: w_dw[ky, kx, c].
    w_dw = jax.random.normal(ks[2], (3, 3, C2), jnp.float32) * s
    b_dw = jax.random.normal(ks[3], (1, C2), jnp.float32) * s
    w_out = jax.random.normal(ks[4], (hidden, in_channels), jnp.float32) * s
    b_out = jax.random.normal(ks[5], (1, in_channels), jnp.float32) * s
    return (w_in, b_in, w_dw, b_dw, w_out, b_out)


def effn_reference_nhwc(x, params, *, bf16_matmul=True):
    """Pure-JAX reference (NHWC). bf16_matmul mirrors the kernel's MXU casts."""
    w_in, b_in, w_dw, b_dw, w_out, b_out = params
    H, W = x.shape[1], x.shape[2]
    if bf16_matmul:
        xc, w_in_c, w_out_c = (x.astype(jnp.bfloat16),
                               w_in.astype(jnp.bfloat16),
                               w_out.astype(jnp.bfloat16))
    else:
        xc, w_in_c, w_out_c = x, w_in, w_out
    y = jnp.einsum('bhwc,cd->bhwd', xc, w_in_c,
                   preferred_element_type=jnp.float32) + b_in[0]
    yp = jnp.pad(y, ((0, 0), (1, 1), (1, 1), (0, 0)))
    acc = jnp.broadcast_to(b_dw[0], y.shape)
    for ky in range(3):
        for kx in range(3):
            acc = acc + yp[:, ky:ky + H, kx:kx + W, :] * w_dw[ky, kx, :]
    hidden = y.shape[-1] // 2
    g = _gelu_exact(acc[..., :hidden]) * acc[..., hidden:]
    gc = g.astype(jnp.bfloat16) if bf16_matmul else g
    out = jnp.einsum('bhwc,co->bhwo', gc, w_out_c,
                     preferred_element_type=jnp.float32) + b_out[0]
    return out


def effn_reference(x_nchw, params, *, bf16_matmul=True):
    x = jnp.transpose(x_nchw, (0, 2, 3, 1))
    out = effn_reference_nhwc(x, params, bf16_matmul=bf16_matmul)
    return jnp.transpose(out, (0, 3, 1, 2))


if __name__ == "__main__":
    key = jax.random.PRNGKey(0)
    k_x, k_p = jax.random.split(key)

    # Small shapes consistent with the module: batch=2, channels=4, 16x16,
    # ffn_expansion_factor=2.0 -> hidden=8, 2*hidden=16.
    B, Cin, H, W = 2, 4, 16, 16
    x = jax.random.normal(k_x, (B, Cin, H, W), jnp.float32)
    params = init_params(k_p, Cin, ffn_expansion_factor=2.0)

    # References (bf16-matched for the strict check, full-f32 for sanity).
    ref_bf16 = effn_reference(x, params, bf16_matmul=True)
    ref_f32 = effn_reference(x, params, bf16_matmul=False)

    # tile_h=4 -> grid (2, 4): exercises boundary tiles (masked halo) and
    # interior tiles (real halo rows fetched from neighbouring rows).
    # Preferred path uses XLU rolls for the kx taps; if that fails to lower or
    # mismatches numerically, fall back to the proven padded-slice tap path.
    out = None
    try:
        cand = jax.block_until_ready(
            effn_forward(x, params, tile_h=4, kx_taps="roll"))
        if float(jnp.max(jnp.abs(cand - ref_bf16))) < 1e-4:
            out = cand
    except Exception:
        out = None
    if out is None:
        out = jax.block_until_ready(
            effn_forward(x, params, tile_h=4, kx_taps="pad"))

    assert out.shape == (B, Cin, H, W), out.shape

    # Strict check vs a reference with identical bf16 matmul casts.
    err_strict = float(jnp.max(jnp.abs(out - ref_bf16)))
    assert err_strict < 1e-4, f"mismatch vs bf16-matched reference: {err_strict}"

    # Loose sanity check vs the full-f32 reference (bf16 MXU operands only).
    err_loose = float(jnp.max(jnp.abs(out - ref_f32)))
    assert err_loose < 5e-2, f"mismatch vs f32 reference: {err_loose}"

    print("KERNEL_OK")
</pallas_src>

<mosaic_0001>
module attributes {stable_mosaic.version = 11 : i64} {
  func.func @kernel(%arg0: i32, %arg1: i32, %arg2: memref<1x4x16x4xf32, #tpu.memory_space<vmem>>, %arg3: memref<1x1x16x4xf32, #tpu.memory_space<vmem>>, %arg4: memref<1x1x16x4xf32, #tpu.memory_space<vmem>>, %arg5: memref<4x16xbf16, #tpu.memory_space<vmem>>, %arg6: memref<1x16xf32, #tpu.memory_space<vmem>>, %arg7: memref<3x3x16xf32, #tpu.memory_space<vmem>>, %arg8: memref<1x16xf32, #tpu.memory_space<vmem>>, %arg9: memref<8x4xbf16, #tpu.memory_space<vmem>>, %arg10: memref<1x4xf32, #tpu.memory_space<vmem>>, %arg11: memref<1x4x16x4xf32, #tpu.memory_space<vmem>>) attributes {dimension_semantics = [#tpu.dimension_semantics<parallel>, #tpu.dimension_semantics<parallel>], iteration_bounds = array<i64: 2, 4>, scalar_prefetch = 0 : i64, scratch_operands = 0 : i64, tpu.core_type = #tpu.core_type<tc>, window_params = [{transform_indices = @transform_0, window_bounds = array<i64: 1, 4, 16, 4>}, {transform_indices = @transform_1, window_bounds = array<i64: 1, 1, 16, 4>}, {transform_indices = @transform_2, window_bounds = array<i64: 1, 1, 16, 4>}, {pipeline_mode = #tpu.pipeline_mode<synchronous>, transform_indices = @transform_3, window_bounds = array<i64: 4, 16>}, {pipeline_mode = #tpu.pipeline_mode<synchronous>, transform_indices = @transform_4, window_bounds = array<i64: 1, 16>}, {pipeline_mode = #tpu.pipeline_mode<synchronous>, transform_indices = @transform_5, window_bounds = array<i64: 3, 3, 16>}, {pipeline_mode = #tpu.pipeline_mode<synchronous>, transform_indices = @transform_6, window_bounds = array<i64: 1, 16>}, {pipeline_mode = #tpu.pipeline_mode<synchronous>, transform_indices = @transform_7, window_bounds = array<i64: 8, 4>}, {pipeline_mode = #tpu.pipeline_mode<synchronous>, transform_indices = @transform_8, window_bounds = array<i64: 1, 4>}, {transform_indices = @transform_9, window_bounds = array<i64: 1, 4, 16, 4>}]} {
    %c0_i32 = arith.constant 0 : i32
    %0 = arith.cmpi sgt, %arg1, %c0_i32 : i32
    %1 = arith.extui %0 : i1 to i32
    %2 = arith.sitofp %1 : i32 to f32
    %c3_i32 = arith.constant 3 : i32
    %3 = arith.cmpi slt, %arg1, %c3_i32 : i32
    %4 = arith.extui %3 : i1 to i32
    %5 = arith.sitofp %4 : i32 to f32
    %c0 = arith.constant 0 : index
    %c0_0 = arith.constant 0 : index
    %c0_1 = arith.constant 0 : index
    %c0_2 = arith.constant 0 : index
    %6 = vector.load %arg3[%c0, %c0_0, %c0_1, %c0_2] : memref<1x1x16x4xf32, #tpu.memory_space<vmem>>, vector<1x1x16x4xf32>
    %7 = vector.shape_cast %6 : vector<1x1x16x4xf32> to vector<16x4xf32>
    %8 = vector.broadcast %2 : f32 to vector<16x4xf32>
    %9 = arith.mulf %7, %8 : vector<16x4xf32>
    %c0_3 = arith.constant 0 : index
    %c0_4 = arith.constant 0 : index
    %c0_5 = arith.constant 0 : index
    %c0_6 = arith.constant 0 : index
    %10 = vector.load %arg4[%c0_3, %c0_4, %c0_5, %c0_6] : memref<1x1x16x4xf32, #tpu.memory_space<vmem>>, vector<1x1x16x4xf32>
    %11 = vector.shape_cast %10 : vector<1x1x16x4xf32> to vector<16x4xf32>
    %12 = vector.broadcast %5 : f32 to vector<16x4xf32>
    %13 = arith.mulf %11, %12 : vector<16x4xf32>
    %14 = vector.shape_cast %9 : vector<16x4xf32> to vector<1x16x4xf32>
    %c0_7 = arith.constant 0 : index
    %c0_8 = arith.constant 0 : index
    %c0_9 = arith.constant 0 : index
    %c0_10 = arith.constant 0 : index
    %15 = vector.load %arg2[%c0_7, %c0_8, %c0_9, %c0_10] : memref<1x4x16x4xf32, #tpu.memory_space<vmem>>, vector<1x4x16x4xf32>
    %16 = vector.shape_cast %15 : vector<1x4x16x4xf32> to vector<4x16x4xf32>
    %17 = vector.shape_cast %13 : vector<16x4xf32> to vector<1x16x4xf32>
    %18 = tpu.concatenate %14, %16, %17 in 0 : vector<1x16x4xf32>, vector<4x16x4xf32>, vector<1x16x4xf32> -> vector<6x16x4xf32>
    %19 = vector.shape_cast %18 : vector<6x16x4xf32> to vector<96x4xf32>
    %20 = arith.truncf %19 : vector<96x4xf32> to vector<96x4xbf16>
    %c0_11 = arith.constant 0 : index
    %c0_12 = arith.constant 0 : index
    %21 = vector.load %arg5[%c0_11, %c0_12] : memref<4x16xbf16, #tpu.memory_space<vmem>>, vector<4x16xbf16>
    %cst = arith.constant dense<0.000000e+00> : vector<96x16xf32>
    %22 = tpu.matmul %20, %21, %cst {dimension_numbers = #tpu.dot_dimension_numbers<[1], [0], [0], [1], [0, 0, 1, 1], [], []>} : vector<96x4xbf16>, vector<4x16xbf16>, vector<96x16xf32> -> vector<96x16xf32>
    %23 = vector.shape_cast %22 : vector<96x16xf32> to vector<6x16x16xf32>
    %24 = vector.broadcast %2 : f32 to vector<1x1x1xf32>
    %cst_13 = arith.constant 1.000000e+00 : f32
    %25 = vector.broadcast %cst_13 : f32 to vector<4x1x1xf32>
    %26 = vector.broadcast %5 : f32 to vector<1x1x1xf32>
    %27 = tpu.concatenate %24, %25, %26 in 0 : vector<1x1x1xf32>, vector<4x1x1xf32>, vector<1x1x1xf32> -> vector<6x1x1xf32>
    %c0_14 = arith.constant 0 : index
    %c0_15 = arith.constant 0 : index
    %28 = vector.load %arg6[%c0_14, %c0_15] : memref<1x16xf32, #tpu.memory_space<vmem>>, vector<1x16xf32>
    %29 = vector.shape_cast %28 : vector<1x16xf32> to vector<1x1x16xf32>
    %30 = vector.broadcast %29 : vector<1x1x16xf32> to vector<6x1x16xf32>
    %31 = vector.broadcast %27 : vector<6x1x1xf32> to vector<6x1x16xf32>
    %32 = arith.mulf %30, %31 : vector<6x1x16xf32>
    %33 = vector.broadcast %32 : vector<6x1x16xf32> to vector<6x16x16xf32>
    %34 = arith.addf %23, %33 : vector<6x16x16xf32>
    %35 = tpu.iota {dimensions = array<i32: 1>} : vector<1x16x1xi32>
    %c0_16 = arith.constant 0 : index
    %c0_17 = arith.constant 0 : index
    %36 = vector.load %arg8[%c0_16, %c0_17] : memref<1x16xf32, #tpu.memory_space<vmem>>, vector<1x16xf32>
    %37 = vector.shape_cast %36 : vector<1x16xf32> to vector<16xf32>
    %38 = vector.shape_cast %37 : vector<16xf32> to vector<1x1x16xf32>
    %39 = vector.broadcast %38 : vector<1x1x16xf32> to vector<4x16x16xf32>
    %c1_i32 = arith.constant 1 : i32
    %40 = tpu.dynamic_rotate %34 by %c1_i32 dim 1 : vector<6x16x16xf32>, i32 -> vector<6x16x16xf32>
    %c15_i32 = arith.constant 15 : i32
    %41 = tpu.dynamic_rotate %34 by %c15_i32 dim 1 : vector<6x16x16xf32>, i32 -> vector<6x16x16xf32>
    %c0_i32_18 = arith.constant 0 : i32
    %42 = vector.broadcast %c0_i32_18 : i32 to vector<1x16x1xi32>
    %43 = arith.cmpi eq, %35, %42 : vector<1x16x1xi32>
    %cst_19 = arith.constant 0.000000e+00 : f32
    %44 = vector.shape_cast %43 : vector<1x16x1xi1> to vector<1x16x1xi1>
    %45 = vector.broadcast %44 : vector<1x16x1xi1> to vector<6x16x16xi1>
    %46 = vector.broadcast %cst_19 : f32 to vector<6x16x16xf32>
    %47 = arith.select %45, %46, %40 : vector<6x16x16xi1>, vector<6x16x16xf32>
    %c15_i32_20 = arith.constant 15 : i32
    %48 = vector.broadcast %c15_i32_20 : i32 to vector<1x16x1xi32>
    %49 = arith.cmpi eq, %35, %48 : vector<1x16x1xi32>
    %cst_21 = arith.constant 0.000000e+00 : f32
    %50 = vector.shape_cast %49 : vector<1x16x1xi1> to vector<1x16x1xi1>
    %51 = vector.broadcast %50 : vector<1x16x1xi1> to vector<6x16x16xi1>
    %52 = vector.broadcast %cst_21 : f32 to vector<6x16x16xf32>
    %53 = arith.select %51, %52, %41 : vector<6x16x16xi1>, vector<6x16x16xf32>
    %54 = vector.extract_strided_slice %47 {offsets = [0, 0, 0], sizes = [4, 16, 16], strides = [1, 1, 1]} : vector<6x16x16xf32> to vector<4x16x16xf32>
    %c0_22 = arith.constant 0 : index
    %c0_23 = arith.constant 0 : index
    %c0_24 = arith.constant 0 : index
    %55 = vector.load %arg7[%c0_22, %c0_23, %c0_24] : memref<3x3x16xf32, #tpu.memory_space<vmem>>, vector<1x1x16xf32>
    %56 = vector.shape_cast %55 : vector<1x1x16xf32> to vector<16xf32>
    %57 = vector.shape_cast %56 : vector<16xf32> to vector<1x1x16xf32>
    %58 = vector.broadcast %57 : vector<1x1x16xf32> to vector<4x16x16xf32>
    %59 = arith.mulf %54, %58 : vector<4x16x16xf32>
    %60 = arith.addf %39, %59 : vector<4x16x16xf32>
    %61 = vector.extract_strided_slice %34 {offsets = [0, 0, 0], sizes = [4, 16, 16], strides = [1, 1, 1]} : vector<6x16x16xf32> to vector<4x16x16xf32>
    %c0_25 = arith.constant 0 : index
    %c1 = arith.constant 1 : index
    %c0_26 = arith.constant 0 : index
    %62 = vector.load %arg7[%c0_25, %c1, %c0_26] : memref<3x3x16xf32, #tpu.memory_space<vmem>>, vector<1x1x16xf32>
    %63 = vector.shape_cast %62 : vector<1x1x16xf32> to vector<16xf32>
    %64 = vector.shape_cast %63 : vector<16xf32> to vector<1x1x16xf32>
    %65 = vector.broadcast %64 : vector<1x1x16xf32> to vector<4x16x16xf32>
    %66 = arith.mulf %61, %65 : vector<4x16x16xf32>
    %67 = arith.addf %60, %66 : vector<4x16x16xf32>
    %68 = vector.extract_strided_slice %53 {offsets = [0, 0, 0], sizes = [4, 16, 16], strides = [1, 1, 1]} : vector<6x16x16xf32> to vector<4x16x16xf32>
    %c0_27 = arith.constant 0 : index
    %c2 = arith.constant 2 : index
    %c0_28 = arith.constant 0 : index
    %69 = vector.load %arg7[%c0_27, %c2, %c0_28] : memref<3x3x16xf32, #tpu.memory_space<vmem>>, vector<1x1x16xf32>
    %70 = vector.shape_cast %69 : vector<1x1x16xf32> to vector<16xf32>
    %71 = vector.shape_cast %70 : vector<16xf32> to vector<1x1x16xf32>
    %72 = vector.broadcast %71 : vector<1x1x16xf32> to vector<4x16x16xf32>
    %73 = arith.mulf %68, %72 : vector<4x16x16xf32>
    %74 = arith.addf %67, %73 : vector<4x16x16xf32>
    %75 = vector.extract_strided_slice %47 {offsets = [1, 0, 0], sizes = [4, 16, 16], strides = [1, 1, 1]} : vector<6x16x16xf32> to vector<4x16x16xf32>
    %c1_29 = arith.constant 1 : index
    %c0_30 = arith.constant 0 : index
    %c0_31 = arith.constant 0 : index
    %76 = vector.load %arg7[%c1_29, %c0_30, %c0_31] : memref<3x3x16xf32, #tpu.memory_space<vmem>>, vector<1x1x16xf32>
    %77 = vector.shape_cast %76 : vector<1x1x16xf32> to vector<16xf32>
    %78 = vector.shape_cast %77 : vector<16xf32> to vector<1x1x16xf32>
    %79 = vector.broadcast %78 : vector<1x1x16xf32> to vector<4x16x16xf32>
    %80 = arith.mulf %75, %79 : vector<4x16x16xf32>
    %81 = arith.addf %74, %80 : vector<4x16x16xf32>
    %82 = vector.extract_strided_slice %34 {offsets = [1, 0, 0], sizes = [4, 16, 16], strides = [1, 1, 1]} : vector<6x16x16xf32> to vector<4x16x16xf32>
    %c1_32 = arith.constant 1 : index
    %c1_33 = arith.constant 1 : index
    %c0_34 = arith.constant 0 : index
    %83 = vector.load %arg7[%c1_32, %c1_33, %c0_34] : memref<3x3x16xf32, #tpu.memory_space<vmem>>, vector<1x1x16xf32>
    %84 = vector.shape_cast %83 : vector<1x1x16xf32> to vector<16xf32>
    %85 = vector.shape_cast %84 : vector<16xf32> to vector<1x1x16xf32>
    %86 = vector.broadcast %85 : vector<1x1x16xf32> to vector<4x16x16xf32>
    %87 = arith.mulf %82, %86 : vector<4x16x16xf32>
    %88 = arith.addf %81, %87 : vector<4x16x16xf32>
    %89 = vector.extract_strided_slice %53 {offsets = [1, 0, 0], sizes = [4, 16, 16], strides = [1, 1, 1]} : vector<6x16x16xf32> to vector<4x16x16xf32>
    %c1_35 = arith.constant 1 : index
    %c2_36 = arith.constant 2 : index
    %c0_37 = arith.constant 0 : index
    %90 = vector.load %arg7[%c1_35, %c2_36, %c0_37] : memref<3x3x16xf32, #tpu.memory_space<vmem>>, vector<1x1x16xf32>
    %91 = vector.shape_cast %90 : vector<1x1x16xf32> to vector<16xf32>
    %92 = vector.shape_cast %91 : vector<16xf32> to vector<1x1x16xf32>
    %93 = vector.broadcast %92 : vector<1x1x16xf32> to vector<4x16x16xf32>
    %94 = arith.mulf %89, %93 : vector<4x16x16xf32>
    %95 = arith.addf %88, %94 : vector<4x16x16xf32>
    %96 = vector.extract_strided_slice %47 {offsets = [2, 0, 0], sizes = [4, 16, 16], strides = [1, 1, 1]} : vector<6x16x16xf32> to vector<4x16x16xf32>
    %c2_38 = arith.constant 2 : index
    %c0_39 = arith.constant 0 : index
    %c0_40 = arith.constant 0 : index
    %97 = vector.load %arg7[%c2_38, %c0_39, %c0_40] : memref<3x3x16xf32, #tpu.memory_space<vmem>>, vector<1x1x16xf32>
    %98 = vector.shape_cast %97 : vector<1x1x16xf32> to vector<16xf32>
    %99 = vector.shape_cast %98 : vector<16xf32> to vector<1x1x16xf32>
    %100 = vector.broadcast %99 : vector<1x1x16xf32> to vector<4x16x16xf32>
    %101 = arith.mulf %96, %100 : vector<4x16x16xf32>
    %102 = arith.addf %95, %101 : vector<4x16x16xf32>
    %103 = vector.extract_strided_slice %34 {offsets = [2, 0, 0], sizes = [4, 16, 16], strides = [1, 1, 1]} : vector<6x16x16xf32> to vector<4x16x16xf32>
    %c2_41 = arith.constant 2 : index
    %c1_42 = arith.constant 1 : index
    %c0_43 = arith.constant 0 : index
    %104 = vector.load %arg7[%c2_41, %c1_42, %c0_43] : memref<3x3x16xf32, #tpu.memory_space<vmem>>, vector<1x1x16xf32>
    %105 = vector.shape_cast %104 : vector<1x1x16xf32> to vector<16xf32>
    %106 = vector.shape_cast %105 : vector<16xf32> to vector<1x1x16xf32>
    %107 = vector.broadcast %106 : vector<1x1x16xf32> to vector<4x16x16xf32>
    %108 = arith.mulf %103, %107 : vector<4x16x16xf32>
    %109 = arith.addf %102, %108 : vector<4x16x16xf32>
    %110 = vector.extract_strided_slice %53 {offsets = [2, 0, 0], sizes = [4, 16, 16], strides = [1, 1, 1]} : vector<6x16x16xf32> to vector<4x16x16xf32>
    %c2_44 = arith.constant 2 : index
    %c2_45 = arith.constant 2 : index
    %c0_46 = arith.constant 0 : index
    %111 = vector.load %arg7[%c2_44, %c2_45, %c0_46] : memref<3x3x16xf32, #tpu.memory_space<vmem>>, vector<1x1x16xf32>
    %112 = vector.shape_cast %111 : vector<1x1x16xf32> to vector<16xf32>
    %113 = vector.shape_cast %112 : vector<16xf32> to vector<1x1x16xf32>
    %114 = vector.broadcast %113 : vector<1x1x16xf32> to vector<4x16x16xf32>
    %115 = arith.mulf %110, %114 : vector<4x16x16xf32>
    %116 = arith.addf %109, %115 : vector<4x16x16xf32>
    %117 = vector.extract_strided_slice %116 {offsets = [0, 0, 0], sizes = [4, 16, 8], strides = [1, 1, 1]} : vector<4x16x16xf32> to vector<4x16x8xf32>
    %cst_47 = arith.constant 5.000000e-01 : f32
    %118 = vector.broadcast %cst_47 : f32 to vector<4x16x8xf32>
    %119 = arith.mulf %118, %117 : vector<4x16x8xf32>
    %cst_48 = arith.constant 0.707106769 : f32
    %120 = vector.broadcast %cst_48 : f32 to vector<4x16x8xf32>
    %121 = arith.mulf %117, %120 : vector<4x16x8xf32>
    %122 = math.erf %121 : vector<4x16x8xf32>
    %cst_49 = arith.constant 1.000000e+00 : f32
    %123 = vector.broadcast %cst_49 : f32 to vector<4x16x8xf32>
    %124 = arith.addf %123, %122 : vector<4x16x8xf32>
    %125 = arith.mulf %119, %124 : vector<4x16x8xf32>
    %126 = vector.extract_strided_slice %116 {offsets = [0, 0, 8], sizes = [4, 16, 8], strides = [1, 1, 1]} : vector<4x16x16xf32> to vector<4x16x8xf32>
    %127 = arith.mulf %125, %126 : vector<4x16x8xf32>
    %128 = vector.shape_cast %127 : vector<4x16x8xf32> to vector<64x8xf32>
    %129 = arith.truncf %128 : vector<64x8xf32> to vector<64x8xbf16>
    %c0_50 = arith.constant 0 : index
    %c0_51 = arith.constant 0 : index
    %130 = vector.load %arg9[%c0_50, %c0_51] : memref<8x4xbf16, #tpu.memory_space<vmem>>, vector<8x4xbf16>
    %cst_52 = arith.constant dense<0.000000e+00> : vector<64x4xf32>
    %131 = tpu.matmul %129, %130, %cst_52 {dimension_numbers = #tpu.dot_dimension_numbers<[1], [0], [0], [1], [0, 0, 1, 1], [], []>} : vector<64x8xbf16>, vector<8x4xbf16>, vector<64x4xf32> -> vector<64x4xf32>
    %c0_53 = arith.constant 0 : index
    %c0_54 = arith.constant 0 : index
    %132 = vector.load %arg10[%c0_53, %c0_54] : memref<1x4xf32, #tpu.memory_space<vmem>>, vector<1x4xf32>
    %133 = vector.broadcast %132 : vector<1x4xf32> to vector<64x4xf32>
    %134 = arith.addf %131, %133 : vector<64x4xf32>
    %135 = vector.shape_cast %134 : vector<64x4xf32> to vector<4x16x4xf32>
    %c0_55 = arith.constant 0 : index
    %c0_56 = arith.constant 0 : index
    %c0_57 = arith.constant 0 : index
    %c0_58 = arith.constant 0 : index
    %136 = vector.load %arg11[%c0_55, %c0_56, %c0_57, %c0_58] : memref<1x4x16x4xf32, #tpu.memory_space<vmem>>, vector<1x4x16x4xf32>
    %137 = vector.shape_cast %136 : vector<1x4x16x4xf32> to vector<4x16x4xf32>
    %138 = vector.shape_cast %135 : vector<4x16x4xf32> to vector<1x4x16x4xf32>
    tpu.vector_store %arg11[%c0_55, %c0_56, %c0_57, %c0_58], %138 {strides = array<i32>} : memref<1x4x16x4xf32, #tpu.memory_space<vmem>>, vector<1x4x16x4xf32>,
    return
  }
  func.func @transform_0(%arg0: i32, %arg1: i32) -> (i32, i32, i32, i32) {
    %c0_i32 = arith.constant 0 : i32
    %c0_i32_0 = arith.constant 0 : i32
    %c0_i32_1 = arith.constant 0 : i32
    return %arg0, %arg1, %c0_i32, %c0_i32_0 : i32, i32, i32, i32
  }
  func.func @transform_1(%arg0: i32, %arg1: i32) -> (i32, i32, i32, i32) {
    %c4_i32 = arith.constant 4 : i32
    %0 = arith.muli %arg1, %c4_i32 : i32
    %c1_i32 = arith.constant 1 : i32
    %1 = arith.subi %0, %c1_i32 : i32
    %c0_i32 = arith.constant 0 : i32
    %2 = arith.maxsi %1, %c0_i32 : i32
    %c0_i32_0 = arith.constant 0 : i32
    %c0_i32_1 = arith.constant 0 : i32
    %c0_i32_2 = arith.constant 0 : i32
    return %arg0, %2, %c0_i32_0, %c0_i32_1 : i32, i32, i32, i32
  }
  func.func @transform_2(%arg0: i32, %arg1: i32) -> (i32, i32, i32, i32) {
    %c4_i32 = arith.constant 4 : i32
    %0 = arith.muli %arg1, %c4_i32 : i32
    %c4_i32_0 = arith.constant 4 : i32
    %1 = arith.addi %0, %c4_i32_0 : i32
    %c15_i32 = arith.constant 15 : i32
    %2 = arith.minsi %1, %c15_i32 : i32
    %c0_i32 = arith.constant 0 : i32
    %c0_i32_1 = arith.constant 0 : i32
    %c0_i32_2 = arith.constant 0 : i32
    return %arg0, %2, %c0_i32, %c0_i32_1 : i32, i32, i32, i32
  }
  func.func @transform_3(%arg0: i32, %arg1: i32) -> (i32, i32) {
    %c0_i32 = arith.constant 0 : i32
    %c0_i32_0 = arith.constant 0 : i32
    %c0_i32_1 = arith.constant 0 : i32
    return %c0_i32, %c0_i32_0 : i32, i32
  }
  func.func @transform_4(%arg0: i32, %arg1: i32) -> (i32, i32) {
    %c0_i32 = arith.constant 0 : i32
    %c0_i32_0 = arith.constant 0 : i32
    %c0_i32_1 = arith.constant 0 : i32
    return %c0_i32, %c0_i32_0 : i32, i32
  }
  func.func @transform_5(%arg0: i32, %arg1: i32) -> (i32, i32, i32) {
    %c0_i32 = arith.constant 0 : i32
    %c0_i32_0 = arith.constant 0 : i32
    %c0_i32_1 = arith.constant 0 : i32
    %c0_i32_2 = arith.constant 0 : i32
    return %c0_i32, %c0_i32_0, %c0_i32_1 : i32, i32, i32
  }
  func.func @transform_6(%arg0: i32, %arg1: i32) -> (i32, i32) {
    %c0_i32 = arith.constant 0 : i32
    %c0_i32_0 = arith.constant 0 : i32
    %c0_i32_1 = arith.constant 0 : i32
    return %c0_i32, %c0_i32_0 : i32, i32
  }
  func.func @transform_7(%arg0: i32, %arg1: i32) -> (i32, i32) {
    %c0_i32 = arith.constant 0 : i32
    %c0_i32_0 = arith.constant 0 : i32
    %c0_i32_1 = arith.constant 0 : i32
    return %c0_i32, %c0_i32_0 : i32, i32
  }
  func.func @transform_8(%arg0: i32, %arg1: i32) -> (i32, i32) {
    %c0_i32 = arith.constant 0 : i32
    %c0_i32_0 = arith.constant 0 : i32
    %c0_i32_1 = arith.constant 0 : i32
    return %c0_i32, %c0_i32_0 : i32, i32
  }
  func.func @transform_9(%arg0: i32, %arg1: i32) -> (i32, i32, i32, i32) {
    %c0_i32 = arith.constant 0 : i32
    %c0_i32_0 = arith.constant 0 : i32
    %c0_i32_1 = arith.constant 0 : i32
    return %arg0, %arg1, %c0_i32, %c0_i32_0 : i32, i32, i32, i32
  }
}

module attributes {stable_mosaic.version = 11 : i64} {
  func.func @kernel(%arg0: i32, %arg1: i32, %arg2: memref<1x4x16x4xf32, #tpu.memory_space<vmem>>, %arg3: memref<1x1x16x4xf32, #tpu.memory_space<vmem>>, %arg4: memref<1x1x16x4xf32, #tpu.memory_space<vmem>>, %arg5: memref<4x16xbf16, #tpu.memory_space<vmem>>, %arg6: memref<1x16xf32, #tpu.memory_space<vmem>>, %arg7: memref<3x3x16xf32, #tpu.memory_space<vmem>>, %arg8: memref<1x16xf32, #tpu.memory_space<vmem>>, %arg9: memref<8x4xbf16, #tpu.memory_space<vmem>>, %arg10: memref<1x4xf32, #tpu.memory_space<vmem>>, %arg11: memref<1x4x16x4xf32, #tpu.memory_space<vmem>>) attributes {dimension_semantics = [#tpu.dimension_semantics<parallel>, #tpu.dimension_semantics<parallel>], iteration_bounds = array<i64: 2, 4>, scalar_prefetch = 0 : i64, scratch_operands = 0 : i64, tpu.core_type = #tpu.core_type<tc>, window_params = [{transform_indices = @transform_0, window_bounds = array<i64: 1, 4, 16, 4>}, {transform_indices = @transform_1, window_bounds = array<i64: 1, 1, 16, 4>}, {transform_indices = @transform_2, window_bounds = array<i64: 1, 1, 16, 4>}, {pipeline_mode = #tpu.pipeline_mode<synchronous>, transform_indices = @transform_3, window_bounds = array<i64: 4, 16>}, {pipeline_mode = #tpu.pipeline_mode<synchronous>, transform_indices = @transform_4, window_bounds = array<i64: 1, 16>}, {pipeline_mode = #tpu.pipeline_mode<synchronous>, transform_indices = @transform_5, window_bounds = array<i64: 3, 3, 16>}, {pipeline_mode = #tpu.pipeline_mode<synchronous>, transform_indices = @transform_6, window_bounds = array<i64: 1, 16>}, {pipeline_mode = #tpu.pipeline_mode<synchronous>, transform_indices = @transform_7, window_bounds = array<i64: 8, 4>}, {pipeline_mode = #tpu.pipeline_mode<synchronous>, transform_indices = @transform_8, window_bounds = array<i64: 1, 4>}, {transform_indices = @transform_9, window_bounds = array<i64: 1, 4, 16, 4>}]} {
    %c0_i32 = arith.constant 0 : i32
    %0 = arith.cmpi sgt, %arg1, %c0_i32 : i32
    %1 = arith.extui %0 : i1 to i32
    %2 = arith.sitofp %1 : i32 to f32
    %c3_i32 = arith.constant 3 : i32
    %3 = arith.cmpi slt, %arg1, %c3_i32 : i32
    %4 = arith.extui %3 : i1 to i32
    %5 = arith.sitofp %4 : i32 to f32
    %c0 = arith.constant 0 : index
    %c0_0 = arith.constant 0 : index
    %c0_1 = arith.constant 0 : index
    %c0_2 = arith.constant 0 : index
    %6 = vector.load %arg3[%c0, %c0_0, %c0_1, %c0_2] : memref<1x1x16x4xf32, #tpu.memory_space<vmem>>, vector<1x1x16x4xf32>
    %7 = vector.shape_cast %6 : vector<1x1x16x4xf32> to vector<16x4xf32>
    %8 = vector.broadcast %2 : f32 to vector<16x4xf32>
    %9 = arith.mulf %7, %8 : vector<16x4xf32>
    %c0_3 = arith.constant 0 : index
    %c0_4 = arith.constant 0 : index
    %c0_5 = arith.constant 0 : index
    %c0_6 = arith.constant 0 : index
    %10 = vector.load %arg4[%c0_3, %c0_4, %c0_5, %c0_6] : memref<1x1x16x4xf32, #tpu.memory_space<vmem>>, vector<1x1x16x4xf32>
    %11 = vector.shape_cast %10 : vector<1x1x16x4xf32> to vector<16x4xf32>
    %12 = vector.broadcast %5 : f32 to vector<16x4xf32>
    %13 = arith.mulf %11, %12 : vector<16x4xf32>
    %14 = vector.shape_cast %9 : vector<16x4xf32> to vector<1x16x4xf32>
    %c0_7 = arith.constant 0 : index
    %c0_8 = arith.constant 0 : index
    %c0_9 = arith.constant 0 : index
    %c0_10 = arith.constant 0 : index
    %15 = vector.load %arg2[%c0_7, %c0_8, %c0_9, %c0_10] : memref<1x4x16x4xf32, #tpu.memory_space<vmem>>, vector<1x4x16x4xf32>
    %16 = vector.shape_cast %15 : vector<1x4x16x4xf32> to vector<4x16x4xf32>
    %17 = vector.shape_cast %13 : vector<16x4xf32> to vector<1x16x4xf32>
    %18 = tpu.concatenate %14, %16, %17 in 0 : vector<1x16x4xf32>, vector<4x16x4xf32>, vector<1x16x4xf32> -> vector<6x16x4xf32>
    %19 = vector.shape_cast %18 : vector<6x16x4xf32> to vector<96x4xf32>
    %20 = arith.truncf %19 : vector<96x4xf32> to vector<96x4xbf16>
    %c0_11 = arith.constant 0 : index
    %c0_12 = arith.constant 0 : index
    %21 = vector.load %arg5[%c0_11, %c0_12] : memref<4x16xbf16, #tpu.memory_space<vmem>>, vector<4x16xbf16>
    %cst = arith.constant dense<0.000000e+00> : vector<96x16xf32>
    %22 = tpu.matmul %20, %21, %cst {dimension_numbers = #tpu.dot_dimension_numbers<[1], [0], [0], [1], [0, 0, 1, 1], [], []>} : vector<96x4xbf16>, vector<4x16xbf16>, vector<96x16xf32> -> vector<96x16xf32>
    %23 = vector.shape_cast %22 : vector<96x16xf32> to vector<6x16x16xf32>
    %24 = vector.broadcast %2 : f32 to vector<1x1x1xf32>
    %cst_13 = arith.constant 1.000000e+00 : f32
    %25 = vector.broadcast %cst_13 : f32 to vector<4x1x1xf32>
    %26 = vector.broadcast %5 : f32 to vector<1x1x1xf32>
    %27 = tpu.concatenate %24, %25, %26 in 0 : vector<1x1x1xf32>, vector<4x1x1xf32>, vector<1x1x1xf32> -> vector<6x1x1xf32>
    %c0_14 = arith.constant 0 : index
    %c0_15 = arith.constant 0 : index
    %28 = vector.load %arg6[%c0_14, %c0_15] : memref<1x16xf32, #tpu.memory_space<vmem>>, vector<1x16xf32>
    %29 = vector.shape_cast %28 : vector<1x16xf32> to vector<1x1x16xf32>
    %30 = vector.broadcast %29 : vector<1x1x16xf32> to vector<6x1x16xf32>
    %31 = vector.broadcast %27 : vector<6x1x1xf32> to vector<6x1x16xf32>
    %32 = arith.mulf %30, %31 : vector<6x1x16xf32>
    %33 = vector.broadcast %32 : vector<6x1x16xf32> to vector<6x16x16xf32>
    %34 = arith.addf %23, %33 : vector<6x16x16xf32>
    %c0_16 = arith.constant 0 : index
    %c0_17 = arith.constant 0 : index
    %35 = vector.load %arg8[%c0_16, %c0_17] : memref<1x16xf32, #tpu.memory_space<vmem>>, vector<1x16xf32>
    %36 = vector.shape_cast %35 : vector<1x16xf32> to vector<16xf32>
    %37 = vector.shape_cast %36 : vector<16xf32> to vector<1x1x16xf32>
    %38 = vector.broadcast %37 : vector<1x1x16xf32> to vector<4x16x16xf32>
    %cst_18 = arith.constant 0.000000e+00 : f32
    %39 = vector.broadcast %cst_18 : f32 to vector<6x1x16xf32>
    %40 = tpu.concatenate %39, %34, %39 in 1 : vector<6x1x16xf32>, vector<6x16x16xf32>, vector<6x1x16xf32> -> vector<6x18x16xf32>
    %41 = vector.extract_strided_slice %40 {offsets = [0, 0, 0], sizes = [4, 16, 16], strides = [1, 1, 1]} : vector<6x18x16xf32> to vector<4x16x16xf32>
    %c0_19 = arith.constant 0 : index
    %c0_20 = arith.constant 0 : index
    %c0_21 = arith.constant 0 : index
    %42 = vector.load %arg7[%c0_19, %c0_20, %c0_21] : memref<3x3x16xf32, #tpu.memory_space<vmem>>, vector<1x1x16xf32>
    %43 = vector.shape_cast %42 : vector<1x1x16xf32> to vector<16xf32>
    %44 = vector.shape_cast %43 : vector<16xf32> to vector<1x1x16xf32>
    %45 = vector.broadcast %44 : vector<1x1x16xf32> to vector<4x16x16xf32>
    %46 = arith.mulf %41, %45 : vector<4x16x16xf32>
    %47 = arith.addf %38, %46 : vector<4x16x16xf32>
    %48 = vector.extract_strided_slice %40 {offsets = [0, 1, 0], sizes = [4, 16, 16], strides = [1, 1, 1]} : vector<6x18x16xf32> to vector<4x16x16xf32>
    %c0_22 = arith.constant 0 : index
    %c1 = arith.constant 1 : index
    %c0_23 = arith.constant 0 : index
    %49 = vector.load %arg7[%c0_22, %c1, %c0_23] : memref<3x3x16xf32, #tpu.memory_space<vmem>>, vector<1x1x16xf32>
    %50 = vector.shape_cast %49 : vector<1x1x16xf32> to vector<16xf32>
    %51 = vector.shape_cast %50 : vector<16xf32> to vector<1x1x16xf32>
    %52 = vector.broadcast %51 : vector<1x1x16xf32> to vector<4x16x16xf32>
    %53 = arith.mulf %48, %52 : vector<4x16x16xf32>
    %54 = arith.addf %47, %53 : vector<4x16x16xf32>
    %55 = vector.extract_strided_slice %40 {offsets = [0, 2, 0], sizes = [4, 16, 16], strides = [1, 1, 1]} : vector<6x18x16xf32> to vector<4x16x16xf32>
    %c0_24 = arith.constant 0 : index
    %c2 = arith.constant 2 : index
    %c0_25 = arith.constant 0 : index
    %56 = vector.load %arg7[%c0_24, %c2, %c0_25] : memref<3x3x16xf32, #tpu.memory_space<vmem>>, vector<1x1x16xf32>
    %57 = vector.shape_cast %56 : vector<1x1x16xf32> to vector<16xf32>
    %58 = vector.shape_cast %57 : vector<16xf32> to vector<1x1x16xf32>
    %59 = vector.broadcast %58 : vector<1x1x16xf32> to vector<4x16x16xf32>
    %60 = arith.mulf %55, %59 : vector<4x16x16xf32>
    %61 = arith.addf %54, %60 : vector<4x16x16xf32>
    %62 = vector.extract_strided_slice %40 {offsets = [1, 0, 0], sizes = [4, 16, 16], strides = [1, 1, 1]} : vector<6x18x16xf32> to vector<4x16x16xf32>
    %c1_26 = arith.constant 1 : index
    %c0_27 = arith.constant 0 : index
    %c0_28 = arith.constant 0 : index
    %63 = vector.load %arg7[%c1_26, %c0_27, %c0_28] : memref<3x3x16xf32, #tpu.memory_space<vmem>>, vector<1x1x16xf32>
    %64 = vector.shape_cast %63 : vector<1x1x16xf32> to vector<16xf32>
    %65 = vector.shape_cast %64 : vector<16xf32> to vector<1x1x16xf32>
    %66 = vector.broadcast %65 : vector<1x1x16xf32> to vector<4x16x16xf32>
    %67 = arith.mulf %62, %66 : vector<4x16x16xf32>
    %68 = arith.addf %61, %67 : vector<4x16x16xf32>
    %69 = vector.extract_strided_slice %40 {offsets = [1, 1, 0], sizes = [4, 16, 16], strides = [1, 1, 1]} : vector<6x18x16xf32> to vector<4x16x16xf32>
    %c1_29 = arith.constant 1 : index
    %c1_30 = arith.constant 1 : index
    %c0_31 = arith.constant 0 : index
    %70 = vector.load %arg7[%c1_29, %c1_30, %c0_31] : memref<3x3x16xf32, #tpu.memory_space<vmem>>, vector<1x1x16xf32>
    %71 = vector.shape_cast %70 : vector<1x1x16xf32> to vector<16xf32>
    %72 = vector.shape_cast %71 : vector<16xf32> to vector<1x1x16xf32>
    %73 = vector.broadcast %72 : vector<1x1x16xf32> to vector<4x16x16xf32>
    %74 = arith.mulf %69, %73 : vector<4x16x16xf32>
    %75 = arith.addf %68, %74 : vector<4x16x16xf32>
    %76 = vector.extract_strided_slice %40 {offsets = [1, 2, 0], sizes = [4, 16, 16], strides = [1, 1, 1]} : vector<6x18x16xf32> to vector<4x16x16xf32>
    %c1_32 = arith.constant 1 : index
    %c2_33 = arith.constant 2 : index
    %c0_34 = arith.constant 0 : index
    %77 = vector.load %arg7[%c1_32, %c2_33, %c0_34] : memref<3x3x16xf32, #tpu.memory_space<vmem>>, vector<1x1x16xf32>
    %78 = vector.shape_cast %77 : vector<1x1x16xf32> to vector<16xf32>
    %79 = vector.shape_cast %78 : vector<16xf32> to vector<1x1x16xf32>
    %80 = vector.broadcast %79 : vector<1x1x16xf32> to vector<4x16x16xf32>
    %81 = arith.mulf %76, %80 : vector<4x16x16xf32>
    %82 = arith.addf %75, %81 : vector<4x16x16xf32>
    %83 = vector.extract_strided_slice %40 {offsets = [2, 0, 0], sizes = [4, 16, 16], strides = [1, 1, 1]} : vector<6x18x16xf32> to vector<4x16x16xf32>
    %c2_35 = arith.constant 2 : index
    %c0_36 = arith.constant 0 : index
    %c0_37 = arith.constant 0 : index
    %84 = vector.load %arg7[%c2_35, %c0_36, %c0_37] : memref<3x3x16xf32, #tpu.memory_space<vmem>>, vector<1x1x16xf32>
    %85 = vector.shape_cast %84 : vector<1x1x16xf32> to vector<16xf32>
    %86 = vector.shape_cast %85 : vector<16xf32> to vector<1x1x16xf32>
    %87 = vector.broadcast %86 : vector<1x1x16xf32> to vector<4x16x16xf32>
    %88 = arith.mulf %83, %87 : vector<4x16x16xf32>
    %89 = arith.addf %82, %88 : vector<4x16x16xf32>
    %90 = vector.extract_strided_slice %40 {offsets = [2, 1, 0], sizes = [4, 16, 16], strides = [1, 1, 1]} : vector<6x18x16xf32> to vector<4x16x16xf32>
    %c2_38 = arith.constant 2 : index
    %c1_39 = arith.constant 1 : index
    %c0_40 = arith.constant 0 : index
    %91 = vector.load %arg7[%c2_38, %c1_39, %c0_40] : memref<3x3x16xf32, #tpu.memory_space<vmem>>, vector<1x1x16xf32>
    %92 = vector.shape_cast %91 : vector<1x1x16xf32> to vector<16xf32>
    %93 = vector.shape_cast %92 : vector<16xf32> to vector<1x1x16xf32>
    %94 = vector.broadcast %93 : vector<1x1x16xf32> to vector<4x16x16xf32>
    %95 = arith.mulf %90, %94 : vector<4x16x16xf32>
    %96 = arith.addf %89, %95 : vector<4x16x16xf32>
    %97 = vector.extract_strided_slice %40 {offsets = [2, 2, 0], sizes = [4, 16, 16], strides = [1, 1, 1]} : vector<6x18x16xf32> to vector<4x16x16xf32>
    %c2_41 = arith.constant 2 : index
    %c2_42 = arith.constant 2 : index
    %c0_43 = arith.constant 0 : index
    %98 = vector.load %arg7[%c2_41, %c2_42, %c0_43] : memref<3x3x16xf32, #tpu.memory_space<vmem>>, vector<1x1x16xf32>
    %99 = vector.shape_cast %98 : vector<1x1x16xf32> to vector<16xf32>
    %100 = vector.shape_cast %99 : vector<16xf32> to vector<1x1x16xf32>
    %101 = vector.broadcast %100 : vector<1x1x16xf32> to vector<4x16x16xf32>
    %102 = arith.mulf %97, %101 : vector<4x16x16xf32>
    %103 = arith.addf %96, %102 : vector<4x16x16xf32>
    %104 = vector.extract_strided_slice %103 {offsets = [0, 0, 0], sizes = [4, 16, 8], strides = [1, 1, 1]} : vector<4x16x16xf32> to vector<4x16x8xf32>
    %cst_44 = arith.constant 5.000000e-01 : f32
    %105 = vector.broadcast %cst_44 : f32 to vector<4x16x8xf32>
    %106 = arith.mulf %105, %104 : vector<4x16x8xf32>
    %cst_45 = arith.constant 0.707106769 : f32
    %107 = vector.broadcast %cst_45 : f32 to vector<4x16x8xf32>
    %108 = arith.mulf %104, %107 : vector<4x16x8xf32>
    %109 = math.erf %108 : vector<4x16x8xf32>
    %cst_46 = arith.constant 1.000000e+00 : f32
    %110 = vector.broadcast %cst_46 : f32 to vector<4x16x8xf32>
    %111 = arith.addf %110, %109 : vector<4x16x8xf32>
    %112 = arith.mulf %106, %111 : vector<4x16x8xf32>
    %113 = vector.extract_strided_slice %103 {offsets = [0, 0, 8], sizes = [4, 16, 8], strides = [1, 1, 1]} : vector<4x16x16xf32> to vector<4x16x8xf32>
    %114 = arith.mulf %112, %113 : vector<4x16x8xf32>
    %115 = vector.shape_cast %114 : vector<4x16x8xf32> to vector<64x8xf32>
    %116 = arith.truncf %115 : vector<64x8xf32> to vector<64x8xbf16>
    %c0_47 = arith.constant 0 : index
    %c0_48 = arith.constant 0 : index
    %117 = vector.load %arg9[%c0_47, %c0_48] : memref<8x4xbf16, #tpu.memory_space<vmem>>, vector<8x4xbf16>
    %cst_49 = arith.constant dense<0.000000e+00> : vector<64x4xf32>
    %118 = tpu.matmul %116, %117, %cst_49 {dimension_numbers = #tpu.dot_dimension_numbers<[1], [0], [0], [1], [0, 0, 1, 1], [], []>} : vector<64x8xbf16>, vector<8x4xbf16>, vector<64x4xf32> -> vector<64x4xf32>
    %c0_50 = arith.constant 0 : index
    %c0_51 = arith.constant 0 : index
    %119 = vector.load %arg10[%c0_50, %c0_51] : memref<1x4xf32, #tpu.memory_space<vmem>>, vector<1x4xf32>
    %120 = vector.broadcast %119 : vector<1x4xf32> to vector<64x4xf32>
    %121 = arith.addf %118, %120 : vector<64x4xf32>
    %122 = vector.shape_cast %121 : vector<64x4xf32> to vector<4x16x4xf32>
    %c0_52 = arith.constant 0 : index
    %c0_53 = arith.constant 0 : index
    %c0_54 = arith.constant 0 : index
    %c0_55 = arith.constant 0 : index
    %123 = vector.load %arg11[%c0_52, %c0_53, %c0_54, %c0_55] : memref<1x4x16x4xf32, #tpu.memory_space<vmem>>, vector<1x4x16x4xf32>
    %124 = vector.shape_cast %123 : vector<1x4x16x4xf32> to vector<4x16x4xf32>
    %125 = vector.shape_cast %122 : vector<4x16x4xf32> to vector<1x4x16x4xf32>
    tpu.vector_store %arg11[%c0_52, %c0_53, %c0_54, %c0_55], %125 {strides = array<i32>} : memref<1x4x16x4xf32, #tpu.memory_space<vmem>>, vector<1x4x16x4xf32>,
    return
  }
  func.func @transform_0(%arg0: i32, %arg1: i32) -> (i32, i32, i32, i32) {
    %c0_i32 = arith.constant 0 : i32
    %c0_i32_0 = arith.constant 0 : i32
    %c0_i32_1 = arith.constant 0 : i32
    return %arg0, %arg1, %c0_i32, %c0_i32_0 : i32, i32, i32, i32
  }
  func.func @transform_1(%arg0: i32, %arg1: i32) -> (i32, i32, i32, i32) {
    %c4_i32 = arith.constant 4 : i32
    %0 = arith.muli %arg1, %c4_i32 : i32
    %c1_i32 = arith.constant 1 : i32
    %1 = arith.subi %0, %c1_i32 : i32
    %c0_i32 = arith.constant 0 : i32
    %2 = arith.maxsi %1, %c0_i32 : i32
    %c0_i32_0 = arith.constant 0 : i32
    %c0_i32_1 = arith.constant 0 : i32
    %c0_i32_2 = arith.constant 0 : i32
    return %arg0, %2, %c0_i32_0, %c0_i32_1 : i32, i32, i32, i32
  }
  func.func @transform_2(%arg0: i32, %arg1: i32) -> (i32, i32, i32, i32) {
    %c4_i32 = arith.constant 4 : i32
    %0 = arith.muli %arg1, %c4_i32 : i32
    %c4_i32_0 = arith.constant 4 : i32
    %1 = arith.addi %0, %c4_i32_0 : i32
    %c15_i32 = arith.constant 15 : i32
    %2 = arith.minsi %1, %c15_i32 : i32
    %c0_i32 = arith.constant 0 : i32
    %c0_i32_1 = arith.constant 0 : i32
    %c0_i32_2 = arith.constant 0 : i32
    return %arg0, %2, %c0_i32, %c0_i32_1 : i32, i32, i32, i32
  }
  func.func @transform_3(%arg0: i32, %arg1: i32) -> (i32, i32) {
    %c0_i32 = arith.constant 0 : i32
    %c0_i32_0 = arith.constant 0 : i32
    %c0_i32_1 = arith.constant 0 : i32
    return %c0_i32, %c0_i32_0 : i32, i32
  }
  func.func @transform_4(%arg0: i32, %arg1: i32) -> (i32, i32) {
    %c0_i32 = arith.constant 0 : i32
    %c0_i32_0 = arith.constant 0 : i32
    %c0_i32_1 = arith.constant 0 : i32
    return %c0_i32, %c0_i32_0 : i32, i32
  }
  func.func @transform_5(%arg0: i32, %arg1: i32) -> (i32, i32, i32) {
    %c0_i32 = arith.constant 0 : i32
    %c0_i32_0 = arith.constant 0 : i32
    %c0_i32_1 = arith.constant 0 : i32
    %c0_i32_2 = arith.constant 0 : i32
    return %c0_i32, %c0_i32_0, %c0_i32_1 : i32, i32, i32
  }
  func.func @transform_6(%arg0: i32, %arg1: i32) -> (i32, i32) {
    %c0_i32 = arith.constant 0 : i32
    %c0_i32_0 = arith.constant 0 : i32
    %c0_i32_1 = arith.constant 0 : i32
    return %c0_i32, %c0_i32_0 : i32, i32
  }
  func.func @transform_7(%arg0: i32, %arg1: i32) -> (i32, i32) {
    %c0_i32 = arith.constant 0 : i32
    %c0_i32_0 = arith.constant 0 : i32
    %c0_i32_1 = arith.constant 0 : i32
    return %c0_i32, %c0_i32_0 : i32, i32
  }
  func.func @transform_8(%arg0: i32, %arg1: i32) -> (i32, i32) {
    %c0_i32 = arith.constant 0 : i32
    %c0_i32_0 = arith.constant 0 : i32
    %c0_i32_1 = arith.constant 0 : i32
    return %c0_i32, %c0_i32_0 : i32, i32
  }
  func.func @transform_9(%arg0: i32, %arg1: i32) -> (i32, i32, i32, i32) {
    %c0_i32 = arith.constant 0 : i32
    %c0_i32_0 = arith.constant 0 : i32
    %c0_i32_1 = arith.constant 0 : i32
    return %arg0, %arg1, %c0_i32, %c0_i32_0 : i32, i32, i32, i32
  }
}

</mosaic_0001>

<llo_original>
// kernel: tpu_custom_call.1
$region0: #{tpu_custom_call.1}
  #allocation0 [shape = 'u32[]', space=smem, size = 0x4, offset = 0x4, fixed_abs, tag = 'smem constant byte address 0x4 - core index']
  #allocation1 [shape = 'u32[144,128]{1,0:T(1,128)}', space=vmem, size = 0x12000, scoped, tag = 'internal scratch']
  %s0 = inlined_call_operand.vmem [shape: f32[2,16,16,4], index: 0, kind: input, shape index: {}]
  %s1 = inlined_call_operand.vmem [shape: f32[2,16,16,4], index: 1, kind: input, shape index: {}]
  %s2 = inlined_call_operand.vmem [shape: f32[2,16,16,4], index: 2, kind: input, shape index: {}]
  %s3 = inlined_call_operand.vmem [shape: bf16[4,16], index: 3, kind: input, shape index: {}]
  %s4 = inlined_call_operand.vmem [shape: f32[1,16], index: 4, kind: input, shape index: {}]
  %s5 = inlined_call_operand.vmem [shape: f32[3,3,16], index: 5, kind: input, shape index: {}]
  %s6 = inlined_call_operand.vmem [shape: f32[1,16], index: 6, kind: input, shape index: {}]
  %s7 = inlined_call_operand.vmem [shape: bf16[8,4], index: 7, kind: input, shape index: {}]
  %s8 = inlined_call_operand.vmem [shape: f32[1,4], index: 8, kind: input, shape index: {}]
  %s9 = inlined_call_operand.vmem [shape: f32[2,16,16,4], index: 9, kind: output, shape index: {}]
  %s10 = sld [smem:[#allocation0]]
  $region69: #{tpu_custom_call.1} parent=0
    _
  %s12 = ssub.s32 1, %s10
  %s13 = scalar_select 0, %s12, %s10
  loop: start=0, step=1, limit=10
  $region2: #{tpu_custom_call.1} parent=0 // loop_pre_header
    _
  $region3: #{tpu_custom_call.1} parent=0 // loop_header
    %s15 = sphi 0, %s19
    %p16 = scmp.ge.s32.totalorder %s15, 10
    %s22 = sphi 0, %s34
    %s23 = sphi 0, %s30
    %s24 = sphi 0, %s22
    %s25 = sphi 0, %s23
    %s26 = sphi 0, %s24
    %s27 = sphi 0, %s25
    %s39 = sphi 0, %s41
    %s42 = sphi 0, %s39
    %s43 = sphi 0, %s42
    %s59 = sphi 0, %s43
    %s75 = sphi 0, %s77
    %s78 = sphi 0, %s75
    %s79 = sphi 0, %s78
    %s95 = sphi 0, %s79
    %s111 = sphi 0, %s113
    %s114 = sphi 0, %s111
    %s115 = sphi 0, %s114
    %s131 = sphi 0, %s115
    %s135 = sphi 0, %s135
    %s137 = sphi 0, %s135
    %s138 = sphi 0, %s137
    %s152 = sphi 0, %s138
    %s156 = sphi 0, %s156
    %s158 = sphi 0, %s156
    %s159 = sphi 0, %s158
    %s173 = sphi 0, %s159
    %s177 = sphi 0, %s177
    %s179 = sphi 0, %s177
    %s180 = sphi 0, %s179
    %s194 = sphi 0, %s180
    %s198 = sphi 0, %s198
    %s200 = sphi 0, %s198
    %s201 = sphi 0, %s200
    %s215 = sphi 0, %s201
    %s219 = sphi 0, %s219
    %s221 = sphi 0, %s219
    %s222 = sphi 0, %s221
    %s236 = sphi 0, %s222
    %s240 = sphi 0, %s240
    %s242 = sphi 0, %s240
    %s243 = sphi 0, %s242
    %s257 = sphi 0, %s243
    %s265 = sphi 0, %s267
    %s268 = sphi 0, %s265
    %s269 = sphi 0, %s268
    %s285 = sphi 0, %s269
  $region4: #{tpu_custom_call.1} parent=0 // loop_header_branch
    %18 = sbr.rel (%p16) target = $region8
  $region5: #{tpu_custom_call.1} parent=0 // loop_body
    %s20 = ssub.s32 %s15, 1
    %s21 = ssub.s32 %s15, 2
    %s28 = sadd.s32 1, %s23
    %p29 = scmp.ge.s32.totalorder %s28, 4
    %s30 = scalar_select %p29, 0, %s28
    %s31 = sadd.s32 1, %s22
    %s32 = scalar_select %p29, %s31, %s22
    %p33 = scmp.ge.s32.totalorder %s32, 2
    %s34 = scalar_select %p33, 0, %s32
    %s35 = ssub.s32 %s22, %s34
    %s36 = ssub.s32 %s23, %s30
    %s37 = sor.u32 %s35, %s36
    %p38 = scmp.eq.s32.totalorder %s37, 0
    %s40 = sadd.s32 %s39, 1
    %s41 = scalar_select %p38, %s39, %s40
    %p44 = pneg %p38
    %p45 = scmp.eq.s32.totalorder %s15, 7
    %p46 = por %p44, %p45
    %p47 = scmp.ne.s32.totalorder %s39, %s42
    %p48 = scmp.eq.s32.totalorder %s15, 0
    %p49 = por %p47, %p48
    %p50 = scmp.ne.s32.totalorder %s39, %s42
    %p51 = scmp.eq.s32.totalorder %s20, 7
    %p52 = por %p50, %p51
    %p53 = scmp.ne.s32.totalorder %s42, %s43
    %p54 = scmp.eq.s32.totalorder %s20, 0
    %p55 = por %p53, %p54
    %p56 = scmp.ne.s32.totalorder %s42, %s43
    %p57 = scmp.eq.s32.totalorder %s21, 7
    %p58 = por %p56, %p57
    %p60 = scmp.ne.s32.totalorder %s43, %s59
    %p61 = scmp.eq.s32.totalorder %s21, 0
    %p62 = por %p60, %p61
    %s63 = smul.u32 %s23, 4
    %s64 = ssub.s32 %s63, 1
    %p65 = scmp.gt.s32.totalorder %s64, 0
    %s66 = scalar_select %p65, %s64, 0
    %s67 = smul.u32 %s30, 4
    %s68 = ssub.s32 %s67, 1
    %p69 = scmp.gt.s32.totalorder %s68, 0
    %s70 = scalar_select %p69, %s68, 0
    %s71 = ssub.s32 %s22, %s34
    %s72 = ssub.s32 %s66, %s70
    %s73 = sor.u32 %s71, %s72
    %p74 = scmp.eq.s32.totalorder %s73, 0
    %s76 = sadd.s32 %s75, 1
    %s77 = scalar_select %p74, %s75, %s76
    %p80 = pneg %p74
    %p81 = scmp.eq.s32.totalorder %s15, 7
    %p82 = por %p80, %p81
    %p83 = scmp.ne.s32.totalorder %s75, %s78
    %p84 = scmp.eq.s32.totalorder %s15, 0
    %p85 = por %p83, %p84
    %p86 = scmp.ne.s32.totalorder %s75, %s78
    %p87 = scmp.eq.s32.totalorder %s20, 7
    %p88 = por %p86, %p87
    %p89 = scmp.ne.s32.totalorder %s78, %s79
    %p90 = scmp.eq.s32.totalorder %s20, 0
    %p91 = por %p89, %p90
    %p92 = scmp.ne.s32.totalorder %s78, %s79
    %p93 = scmp.eq.s32.totalorder %s21, 7
    %p94 = por %p92, %p93
    %p96 = scmp.ne.s32.totalorder %s79, %s95
    %p97 = scmp.eq.s32.totalorder %s21, 0
    %p98 = por %p96, %p97
    %s99 = smul.u32 %s23, 4
    %s100 = sadd.s32 %s99, 4
    %p101 = scmp.lt.s32.totalorder %s100, 15
    %s102 = scalar_select %p101, %s100, 15
    %s103 = smul.u32 %s30, 4
    %s104 = sadd.s32 %s103, 4
    %p105 = scmp.lt.s32.totalorder %s104, 15
    %s106 = scalar_select %p105, %s104, 15
    %s107 = ssub.s32 %s22, %s34
    %s108 = ssub.s32 %s102, %s106
    %s109 = sor.u32 %s107, %s108
    %p110 = scmp.eq.s32.totalorder %s109, 0
    %s112 = sadd.s32 %s111, 1
    %s113 = scalar_select %p110, %s111, %s112
    %p116 = pneg %p110
    %p117 = scmp.eq.s32.totalorder %s15, 7
    %p118 = por %p116, %p117
    %p119 = scmp.ne.s32.totalorder %s111, %s114
    %p120 = scmp.eq.s32.totalorder %s15, 0
    %p121 = por %p119, %p120
    %p122 = scmp.ne.s32.totalorder %s111, %s114
    %p123 = scmp.eq.s32.totalorder %s20, 7
    %p124 = por %p122, %p123
    %p125 = scmp.ne.s32.totalorder %s114, %s115
    %p126 = scmp.eq.s32.totalorder %s20, 0
    %p127 = por %p125, %p126
    %p128 = scmp.ne.s32.totalorder %s114, %s115
    %p129 = scmp.eq.s32.totalorder %s21, 7
    %p130 = por %p128, %p129
    %p132 = scmp.ne.s32.totalorder %s115, %s131
    %p133 = scmp.eq.s32.totalorder %s21, 0
    %p134 = por %p132, %p133
    %s136 = sadd.s32 %s135, 1
    %p139 = scmp.eq.s32.totalorder %s15, 7
    %p140 = scmp.ne.s32.totalorder %s135, %s137
    %p141 = scmp.eq.s32.totalorder %s15, 0
    %p142 = por %p140, %p141
    %p143 = scmp.ne.s32.totalorder %s135, %s137
    %p144 = scmp.eq.s32.totalorder %s20, 7
    %p145 = por %p143, %p144
    %p146 = scmp.ne.s32.totalorder %s137, %s138
    %p147 = scmp.eq.s32.totalorder %s20, 0
    %p148 = por %p146, %p147
    %p149 = scmp.ne.s32.totalorder %s137, %s138
    %p150 = scmp.eq.s32.totalorder %s21, 7
    %p151 = por %p149, %p150
    %p153 = scmp.ne.s32.totalorder %s138, %s152
    %p154 = scmp.eq.s32.totalorder %s21, 0
    %p155 = por %p153, %p154
    %s157 = sadd.s32 %s156, 1
    %p160 = scmp.eq.s32.totalorder %s15, 7
    %p161 = scmp.ne.s32.totalorder %s156, %s158
    %p162 = scmp.eq.s32.totalorder %s15, 0
    %p163 = por %p161, %p162
    %p164 = scmp.ne.s32.totalorder %s156, %s158
    %p165 = scmp.eq.s32.totalorder %s20, 7
    %p166 = por %p164, %p165
    %p167 = scmp.ne.s32.totalorder %s158, %s159
    %p168 = scmp.eq.s32.totalorder %s20, 0
    %p169 = por %p167, %p168
    %p170 = scmp.ne.s32.totalorder %s158, %s159
    %p171 = scmp.eq.s32.totalorder %s21, 7
    %p172 = por %p170, %p171
    %p174 = scmp.ne.s32.totalorder %s159, %s173
    %p175 = scmp.eq.s32.totalorder %s21, 0
    %p176 = por %p174, %p175
    %s178 = sadd.s32 %s177, 1
    %p181 = scmp.eq.s32.totalorder %s15, 7
    %p182 = scmp.ne.s32.totalorder %s177, %s179
    %p183 = scmp.eq.s32.totalorder %s15, 0
    %p184 = por %p182, %p183
    %p185 = scmp.ne.s32.totalorder %s177, %s179
    %p186 = scmp.eq.s32.totalorder %s20, 7
    %p187 = por %p185, %p186
    %p188 = scmp.ne.s32.totalorder %s179, %s180
    %p189 = scmp.eq.s32.totalorder %s20, 0
    %p190 = por %p188, %p189
    %p191 = scmp.ne.s32.totalorder %s179, %s180
    %p192 = scmp.eq.s32.totalorder %s21, 7
    %p193 = por %p191, %p192
    %p195 = scmp.ne.s32.totalorder %s180, %s194
    %p196 = scmp.eq.s32.totalorder %s21, 0
    %p197 = por %p195, %p196
    %s199 = sadd.s32 %s198, 1
    %p202 = scmp.eq.s32.totalorder %s15, 7
    %p203 = scmp.ne.s32.totalorder %s198, %s200
    %p204 = scmp.eq.s32.totalorder %s15, 0
    %p205 = por %p203, %p204
    %p206 = scmp.ne.s32.totalorder %s198, %s200
    %p207 = scmp.eq.s32.totalorder %s20, 7
    %p208 = por %p206, %p207
    %p209 = scmp.ne.s32.totalorder %s200, %s201
    %p210 = scmp.eq.s32.totalorder %s20, 0
    %p211 = por %p209, %p210
    %p212 = scmp.ne.s32.totalorder %s200, %s201
    %p213 = scmp.eq.s32.totalorder %s21, 7
    %p214 = por %p212, %p213
    %p216 = scmp.ne.s32.totalorder %s201, %s215
    %p217 = scmp.eq.s32.totalorder %s21, 0
    %p218 = por %p216, %p217
    %s220 = sadd.s32 %s219, 1
    %p223 = scmp.eq.s32.totalorder %s15, 7
    %p224 = scmp.ne.s32.totalorder %s219, %s221
    %p225 = scmp.eq.s32.totalorder %s15, 0
    %p226 = por %p224, %p225
    %p227 = scmp.ne.s32.totalorder %s219, %s221
    %p228 = scmp.eq.s32.totalorder %s20, 7
    %p229 = por %p227, %p228
    %p230 = scmp.ne.s32.totalorder %s221, %s222
    %p231 = scmp.eq.s32.totalorder %s20, 0
    %p232 = por %p230, %p231
    %p233 = scmp.ne.s32.totalorder %s221, %s222
    %p234 = scmp.eq.s32.totalorder %s21, 7
    %p235 = por %p233, %p234
    %p237 = scmp.ne.s32.totalorder %s222, %s236
    %p238 = scmp.eq.s32.totalorder %s21, 0
    %p239 = por %p237, %p238
    %s241 = sadd.s32 %s240, 1
    %p244 = scmp.eq.s32.totalorder %s15, 7
    %p245 = scmp.ne.s32.totalorder %s240, %s242
    %p246 = scmp.eq.s32.totalorder %s15, 0
    %p247 = por %p245, %p246
    %p248 = scmp.ne.s32.totalorder %s240, %s242
    %p249 = scmp.eq.s32.totalorder %s20, 7
    %p250 = por %p248, %p249
    %p251 = scmp.ne.s32.totalorder %s242, %s243
    %p252 = scmp.eq.s32.totalorder %s20, 0
    %p253 = por %p251, %p252
    %p254 = scmp.ne.s32.totalorder %s242, %s243
    %p255 = scmp.eq.s32.totalorder %s21, 7
    %p256 = por %p254, %p255
    %p258 = scmp.ne.s32.totalorder %s243, %s257
    %p259 = scmp.eq.s32.totalorder %s21, 0
    %p260 = por %p258, %p259
    %s261 = ssub.s32 %s22, %s34
    %s262 = ssub.s32 %s23, %s30
    %s263 = sor.u32 %s261, %s262
    %p264 = scmp.eq.s32.totalorder %s263, 0
    %s266 = sadd.s32 %s265, 1
    %s267 = scalar_select %p264, %s265, %s266
    %p270 = pneg %p264
    %p271 = scmp.eq.s32.totalorder %s15, 7
    %p272 = por %p270, %p271
    %p273 = scmp.ne.s32.totalorder %s265, %s268
    %p274 = scmp.eq.s32.totalorder %s15, 0
    %p275 = por %p273, %p274
    %p276 = scmp.ne.s32.totalorder %s265, %s268
    %p277 = scmp.eq.s32.totalorder %s20, 7
    %p278 = por %p276, %p277
    %p279 = scmp.ne.s32.totalorder %s268, %s269
    %p280 = scmp.eq.s32.totalorder %s20, 0
    %p281 = por %p279, %p280
    %p282 = scmp.ne.s32.totalorder %s268, %s269
    %p283 = scmp.eq.s32.totalorder %s21, 7
    %p284 = por %p282, %p283
    %p286 = scmp.ne.s32.totalorder %s269, %s285
    %p287 = scmp.eq.s32.totalorder %s21, 0
    %p288 = por %p286, %p287
    %p289 = scmp.le.s32.totalorder 1, %s15
    %p290 = scmp.lt.s32.totalorder %s15, 9
    %p291 = pnand %p289, %p290
    %p292 = pneg %p291
    // Predicated region
    $region9: #{tpu_custom_call.1} parent=5 // pred_check
      _
    $region10: #{tpu_custom_call.1} parent=5 // pred_check_branch
      %294 = sbr.rel (%p291) target = $region12
    $region11: #{tpu_custom_call.1} parent=5 // pred_region
      %s295 = ssub.s32 %s15, 1
      // Predicated region
      $region13: #{tpu_custom_call.1} parent=11 // pred_check
        %p296 = pneg %p148
      $region14: #{tpu_custom_call.1} parent=11 // pred_check_branch
        %298 = sbr.rel (%p296) target = $region16
      $region15: #{tpu_custom_call.1} parent=11 // pred_region
        _
      $region16: #{tpu_custom_call.1} parent=11 // pred_fallthru
        _
      // Predicated region
      $region17: #{tpu_custom_call.1} parent=11 // pred_check
        %p299 = pneg %p169
      $region18: #{tpu_custom_call.1} parent=11 // pred_check_branch
        %301 = sbr.rel (%p299) target = $region20
      $region19: #{tpu_custom_call.1} parent=11 // pred_region
        _
      $region20: #{tpu_custom_call.1} parent=11 // pred_fallthru
        _
      // Predicated region
      $region21: #{tpu_custom_call.1} parent=11 // pred_check
        %p302 = pneg %p190
      $region22: #{tpu_custom_call.1} parent=11 // pred_check_branch
        %304 = sbr.rel (%p302) target = $region24
      $region23: #{tpu_custom_call.1} parent=11 // pred_region
        _
      $region24: #{tpu_custom_call.1} parent=11 // pred_fallthru
        _
      // Predicated region
      $region25: #{tpu_custom_call.1} parent=11 // pred_check
        %p305 = pneg %p211
      $region26: #{tpu_custom_call.1} parent=11 // pred_check_branch
        %307 = sbr.rel (%p305) target = $region28
      $region27: #{tpu_custom_call.1} parent=11 // pred_region
        _
      $region28: #{tpu_custom_call.1} parent=11 // pred_fallthru
        _
      // Predicated region
      $region29: #{tpu_custom_call.1} parent=11 // pred_check
        %p308 = pneg %p232
      $region30: #{tpu_custom_call.1} parent=11 // pred_check_branch
        %310 = sbr.rel (%p308) target = $region32
      $region31: #{tpu_custom_call.1} parent=11 // pred_region
        _
      $region32: #{tpu_custom_call.1} parent=11 // pred_fallthru
        _
      // Predicated region
      $region33: #{tpu_custom_call.1} parent=11 // pred_check
        %p311 = pneg %p253
      $region34: #{tpu_custom_call.1} parent=11 // pred_check_branch
        %313 = sbr.rel (%p311) target = $region36
      $region35: #{tpu_custom_call.1} parent=11 // pred_region
        _
      $region36: #{tpu_custom_call.1} parent=11 // pred_fallthru
        _
    $region12: #{tpu_custom_call.1} parent=5 // pred_fallthru
      _
    %p314 = scmp.lt.s32.totalorder %s15, 8
    // Predicated region
    $region37: #{tpu_custom_call.1} parent=5 // pred_check
      %p315 = pneg %p314
    $region38: #{tpu_custom_call.1} parent=5 // pred_check_branch
      %317 = sbr.rel (%p315) target = $region40
    $region39: #{tpu_custom_call.1} parent=5 // pred_region
      // Predicated region
      $region41: #{tpu_custom_call.1} parent=39 // pred_check
        %p318 = pneg %p49
      $region42: #{tpu_custom_call.1} parent=39 // pred_check_branch
        %320 = sbr.rel (%p318) target = $region44
      $region43: #{tpu_custom_call.1} parent=39 // pred_region
        %s321 = smul.u32 4, %s23
        %p322 = scmp.lt.s32.totalorder %s22, 1
        %s323 = scalar_select %p322, %s22, 1
        %p324 = scmp.lt.s32.totalorder %s321, 15
        %s325 = scalar_select %p324, %s321, 15
        %s326 = smul.addr %s325, 2
        %s327 = smul.addr %s323, 32
        %s328 = sadd.s32 %s326, %s327
        %s329 = smul.addr %s328, 8
        %s330 = scalar_lea.vmem %s0, %s329
        %s331 = smul.u32 4, %s23
      $region44: #{tpu_custom_call.1} parent=39 // pred_fallthru
        _
      // Predicated region
      $region45: #{tpu_custom_call.1} parent=39 // pred_check
        %p332 = pneg %p85
      $region46: #{tpu_custom_call.1} parent=39 // pred_check_branch
        %334 = sbr.rel (%p332) target = $region48
      $region47: #{tpu_custom_call.1} parent=39 // pred_region
        %s335 = smul.u32 %s23, 4
        %s336 = ssub.s32 %s335, 1
        %p337 = scmp.gt.s32.totalorder %s336, 0
        %s338 = scalar_select %p337, %s336, 0
        %p339 = scmp.lt.s32.totalorder %s22, 1
        %s340 = scalar_select %p339, %s22, 1
        %p341 = scmp.lt.s32.totalorder %s338, 15
        %s342 = scalar_select %p341, %s338, 15
        %s343 = smul.addr %s342, 2
        %s344 = smul.addr %s340, 32
        %s345 = sadd.s32 %s343, %s344
        %s346 = smul.addr %s345, 8
        %s347 = scalar_lea.vmem %s1, %s346
        %s348 = smul.u32 %s23, 4
        %s349 = ssub.s32 %s348, 1
        %p350 = scmp.gt.s32.totalorder %s349, 0
        %s351 = scalar_select %p350, %s349, 0
      $region48: #{tpu_custom_call.1} parent=39 // pred_fallthru
        _
      // Predicated region
      $region49: #{tpu_custom_call.1} parent=39 // pred_check
        %p352 = pneg %p121
      $region50: #{tpu_custom_call.1} parent=39 // pred_check_branch
        %354 = sbr.rel (%p352) target = $region52
      $region51: #{tpu_custom_call.1} parent=39 // pred_region
        %s355 = smul.u32 %s23, 4
        %s356 = sadd.s32 %s355, 4
        %p357 = scmp.lt.s32.totalorder %s356, 15
        %s358 = scalar_select %p357, %s356, 15
        %p359 = scmp.lt.s32.totalorder %s22, 1
        %s360 = scalar_select %p359, %s22, 1
        %p361 = scmp.lt.s32.totalorder %s358, 15
        %s362 = scalar_select %p361, %s358, 15
        %s363 = smul.addr %s362, 2
        %s364 = smul.addr %s360, 32
        %s365 = sadd.s32 %s363, %s364
        %s366 = smul.addr %s365, 8
        %s367 = scalar_lea.vmem %s2, %s366
        %s368 = smul.u32 %s23, 4
        %s369 = sadd.s32 %s368, 4
        %p370 = scmp.lt.s32.totalorder %s369, 15
        %s371 = scalar_select %p370, %s369, 15
      $region52: #{tpu_custom_call.1} parent=39 // pred_fallthru
        _
    $region40: #{tpu_custom_call.1} parent=5 // pred_fallthru
      _
    %p372 = scmp.le.s32.totalorder 1, %s15
    %p373 = scmp.lt.s32.totalorder %s15, 9
    %p374 = pnand %p372, %p373
    %p375 = pneg %p374
    // Predicated region
    $region53: #{tpu_custom_call.1} parent=5 // pred_check
      _
    $region54: #{tpu_custom_call.1} parent=5 // pred_check_branch
      %377 = sbr.rel (%p374) target = $region56
    $region55: #{tpu_custom_call.1} parent=5 // pred_region
      %s378 = ssub.s32 %s15, 1
      %s379 = smul.u32 4, %s25
      %p380 = scmp.lt.s32.totalorder %s24, 1
      %s381 = scalar_select %p380, %s24, 1
      %p382 = scmp.lt.s32.totalorder %s379, 15
      %s383 = scalar_select %p382, %s379, 15
      %s384 = smul.addr %s383, 2
      %s385 = smul.addr %s381, 32
      %s386 = sadd.s32 %s384, %s385
      %s387 = smul.addr %s386, 8
      %s388 = scalar_lea.vmem %s0, %s387
      %p389 = pneg %p55
      %p390 = pneg %p52
      %s391 = smul.u32 %s25, 4
      %s392 = ssub.s32 %s391, 1
      %p393 = scmp.gt.s32.totalorder %s392, 0
      %s394 = scalar_select %p393, %s392, 0
      %p395 = scmp.lt.s32.totalorder %s24, 1
      %s396 = scalar_select %p395, %s24, 1
      %p397 = scmp.lt.s32.totalorder %s394, 15
      %s398 = scalar_select %p397, %s394, 15
      %s399 = smul.addr %s398, 2
      %s400 = smul.addr %s396, 32
      %s401 = sadd.s32 %s399, %s400
      %s402 = smul.addr %s401, 8
      %s403 = scalar_lea.vmem %s1, %s402
      %p404 = pneg %p91
      %p405 = pneg %p88
      %s406 = smul.u32 %s25, 4
      %s407 = sadd.s32 %s406, 4
      %p408 = scmp.lt.s32.totalorder %s407, 15
      %s409 = scalar_select %p408, %s407, 15
      %p410 = scmp.lt.s32.totalorder %s24, 1
      %s411 = scalar_select %p410, %s24, 1
      %p412 = scmp.lt.s32.totalorder %s409, 15
      %s413 = scalar_select %p412, %s409, 15
      %s414 = smul.addr %s413, 2
      %s415 = smul.addr %s411, 32
      %s416 = sadd.s32 %s414, %s415
      %s417 = smul.addr %s416, 8
      %s418 = scalar_lea.vmem %s2, %s417
      %p419 = pneg %p127
      %p420 = pneg %p124
      %p421 = pneg %p148
      %p422 = pneg %p145
      %p423 = pneg %p169
      %p424 = pneg %p166
      %p425 = pneg %p190
      %p426 = pneg %p187
      %p427 = pneg %p211
      %p428 = pneg %p208
      %p429 = pneg %p232
      %p430 = pneg %p229
      %p431 = pneg %p253
      %p432 = pneg %p250
      %p433 = pneg %p281
      %p434 = pneg %p278
      %s435 = smul.u32 4, %s25
      %p436 = scmp.lt.s32.totalorder %s24, 1
      %s437 = scalar_select %p436, %s24, 1
      %p438 = scmp.lt.s32.totalorder %s435, 15
      %s439 = scalar_select %p438, %s435, 15
      %s440 = smul.addr %s439, 2
      %s441 = smul.addr %s437, 32
      %s442 = sadd.s32 %s440, %s441
      %s443 = smul.addr %s442, 8
      %s444 = scalar_lea.vmem %s9, %s443
      %s445 = smul.u32 4, %s25
      %p446 = scmp.lt.s32.totalorder %s24, 1
      %s447 = scalar_select %p446, %s24, 1
      %p448 = scmp.lt.s32.totalorder %s445, 15
      %s449 = scalar_select %p448, %s445, 15
      %s450 = smul.addr %s449, 2
      %s451 = smul.addr %s447, 32
      %s452 = sadd.s32 %s450, %s451
      %s453 = smul.addr %s452, 8
      %s454 = scalar_lea.vmem %s0, %s453
      %s455 = smul.u32 4, %s25
      %s456 = smul.u32 %s25, 4
      %s457 = ssub.s32 %s456, 1
      %p458 = scmp.gt.s32.totalorder %s457, 0
      %s459 = scalar_select %p458, %s457, 0
      %p460 = scmp.lt.s32.totalorder %s24, 1
      %s461 = scalar_select %p460, %s24, 1
      %p462 = scmp.lt.s32.totalorder %s459, 15
      %s463 = scalar_select %p462, %s459, 15
      %s464 = smul.addr %s463, 2
      %s465 = smul.addr %s461, 32
      %s466 = sadd.s32 %s464, %s465
      %s467 = smul.addr %s466, 8
      %s468 = scalar_lea.vmem %s1, %s467
      %s469 = smul.u32 %s25, 4
      %s470 = ssub.s32 %s469, 1
      %p471 = scmp.gt.s32.totalorder %s470, 0
      %s472 = scalar_select %p471, %s470, 0
      %s473 = smul.u32 %s25, 4
      %s474 = sadd.s32 %s473, 4
      %p475 = scmp.lt.s32.totalorder %s474, 15
      %s476 = scalar_select %p475, %s474, 15
      %p477 = scmp.lt.s32.totalorder %s24, 1
      %s478 = scalar_select %p477, %s24, 1
      %p479 = scmp.lt.s32.totalorder %s476, 15
      %s480 = scalar_select %p479, %s476, 15
      %s481 = smul.addr %s480, 2
      %s482 = smul.addr %s478, 32
      %s483 = sadd.s32 %s481, %s482
      %s484 = smul.addr %s483, 8
      %s485 = scalar_lea.vmem %s2, %s484
      %s486 = smul.u32 %s25, 4
      %s487 = sadd.s32 %s486, 4
      %p488 = scmp.lt.s32.totalorder %s487, 15
      %s489 = scalar_select %p488, %s487, 15
      %s490 = smul.u32 4, %s25
      %p491 = scmp.lt.s32.totalorder %s24, 1
      %s492 = scalar_select %p491, %s24, 1
      %p493 = scmp.lt.s32.totalorder %s490, 15
      %s494 = scalar_select %p493, %s490, 15
      %s495 = smul.addr %s494, 2
      %s496 = smul.addr %s492, 32
      %s497 = sadd.s32 %s495, %s496
      %s498 = smul.addr %s497, 8
      %s499 = scalar_lea.vmem %s9, %s498
      %s500 = smul.u32 4, %s25
      %p502 = scmp.gt.s32.totalorder %s25, 0
      %s503 = scalar_select %p502, 1, 0
      %s504 = scvt.s32.f32 %s503
      %p505 = scmp.lt.s32.totalorder %s25, 3
      %s506 = scalar_select %p505, 1, 0
      %s507 = scvt.s32.f32 %s506
      %v508 = vld [vmem:[%s468] sm:$0xff]
      %v509 = vld [vmem:[%s468 + $0x8] sm:$0xff]
      %v510 = vstv %s504
      %v511 = vmul.f32 %v508, %v510
      %v512 = vmul.f32 %v509, %v510
      %v513 = vld [vmem:[%s485] sm:$0xff]
      %v514 = vld [vmem:[%s485 + $0x8] sm:$0xff]
      %v515 = vstv %s507
      %v516 = vmul.f32 %v513, %v515
      %v517 = vmul.f32 %v514, %v515
      %v518 = vld [vmem:[%s454] sm:$0xff]
      %v519 = vld [vmem:[%s454 + $0x8] sm:$0xff]
      %v520 = vld [vmem:[%s454 + $0x10] sm:$0xff]
      %v521 = vld [vmem:[%s454 + $0x18] sm:$0xff]
      %v522 = vld [vmem:[%s454 + $0x20] sm:$0xff]
      %v523 = vld [vmem:[%s454 + $0x28] sm:$0xff]
      %v524 = vld [vmem:[%s454 + $0x30] sm:$0xff]
      %v525 = vld [vmem:[%s454 + $0x38] sm:$0xff]
      %v526 = vpack.c.bf16 %v512, %v511
      %v527 = vpack.c.bf16 %v519, %v518
      %v528 = vpack.c.bf16 %v521, %v520
      %v529 = vpack.c.bf16 %v523, %v522
      %v530 = vpack.c.bf16 %v525, %v524
      %v531 = vpack.c.bf16 %v517, %v516
      %v532 = vld [vmem:[%s3] sm:$0x3]
      %vm533 = vcmask 31744
      %v535 = vsel %vm533, %v526, 0
      %v538 = vsel %vm533, %v527, 0
      %v541 = vsel %vm533, %v528, 0
      %v544 = vsel %vm533, %v529, 0
      %v547 = vsel %vm533, %v530, 0
      %v550 = vsel %vm533, %v531, 0
      %vm552 = vcmask 1041408
      %v554 = vsel %vm552, %v532, 0
      %556 = vmatprep.subr.bf16.mxu0 0
      %557 = vmatpush1.bf16.msra.mxu0 %v554
      %558 = vmatprep.subr.bf16.mxu0 0
      %559 = vmatpush1.bf16.msra.mxu0 0
      %560 = vmatprep.subr.bf16.mxu0 0
      %561 = vmatpush1.bf16.msra.mxu0 0
      %562 = vmatprep.subr.bf16.mxu0 0
      %563 = vmatpush1.bf16.msra.mxu0 0
      %564 = vmatprep.subr.bf16.mxu0 0
      %565 = vmatpush1.bf16.msra.mxu0 0
      %566 = vmatprep.subr.bf16.mxu0 0
      %567 = vmatpush1.bf16.msra.mxu0 0
      %568 = vmatprep.subr.bf16.mxu0 0
      %569 = vmatpush1.bf16.msra.mxu0 0
      %570 = vmatprep.subr.bf16.mxu0 0
      %571 = vmatpush1.bf16.msra.mxu0 0
      %572 = vmatprep.subr.bf16.mxu0 0
      %573 = vmatpush1.bf16.msra.mxu0 0
      %574 = vmatprep.subr.bf16.mxu0 0
      %575 = vmatpush1.bf16.msra.mxu0 0
      %576 = vmatprep.subr.bf16.mxu0 0
      %577 = vmatpush1.bf16.msra.mxu0 0
      %578 = vmatprep.subr.bf16.mxu0 0
      %579 = vmatpush1.bf16.msra.mxu0 0
      %580 = vmatprep.subr.bf16.mxu0 0
      %581 = vmatpush1.bf16.msra.mxu0 0
      %582 = vmatprep.subr.bf16.mxu0 0
      %583 = vmatpush1.bf16.msra.mxu0 0
      %584 = vmatprep.subr.bf16.mxu0 0
      %585 = vmatpush1.bf16.msra.mxu0 0
      %586 = vmatprep.subr.bf16.mxu0 0
      %587 = vmatpush1.bf16.msra.mxu0 0
      %588 = vmatprep.mubr.bf16.mxu0 0
      %589 = vmatmul.mubr.bf16.gmra.mrb[0].mxu0 %v535
      %v590 = vpop.f32.mrb[0].mxu0
      %v591 = vadd.f32 0.0, %v590
      %v592 = vpop.f32.mrb[0].mxu0
      %v593 = vpop.f32.mrb[0].mxu0
      %v594 = vadd.f32 0.0, %v593
      %v595 = vpop.f32.mrb[0].mxu0
      %596 = vmatprep.mubr.bf16.mxu0 0
      %597 = vmatmul.mubr.bf16.gmra.mrb[0].mxu0 %v538
      %v598 = vpop.f32.mrb[0].mxu0
      %v599 = vadd.f32 0.0, %v598
      %v600 = vpop.f32.mrb[0].mxu0
      %v601 = vpop.f32.mrb[0].mxu0
      %v602 = vadd.f32 0.0, %v601
      %v603 = vpop.f32.mrb[0].mxu0
      %604 = vmatprep.mubr.bf16.mxu0 0
      %605 = vmatmul.mubr.bf16.gmra.mrb[0].mxu0 %v541
      %v606 = vpop.f32.mrb[0].mxu0
      %v607 = vadd.f32 0.0, %v606
      %v608 = vpop.f32.mrb[0].mxu0
      %v609 = vpop.f32.mrb[0].mxu0
      %v610 = vadd.f32 0.0, %v609
      %v611 = vpop.f32.mrb[0].mxu0
      %612 = vmatprep.mubr.bf16.mxu0 0
      %613 = vmatmul.mubr.bf16.gmra.mrb[0].mxu0 %v544
      %v614 = vpop.f32.mrb[0].mxu0
      %v615 = vadd.f32 0.0, %v614
      %v616 = vpop.f32.mrb[0].mxu0
      %v617 = vpop.f32.mrb[0].mxu0
      %v618 = vadd.f32 0.0, %v617
      %v619 = vpop.f32.mrb[0].mxu0
      %620 = vmatprep.mubr.bf16.mxu0 0
      %621 = vmatmul.mubr.bf16.gmra.mrb[0].mxu0 %v547
      %v622 = vpop.f32.mrb[0].mxu0
      %v623 = vadd.f32 0.0, %v622
      %v624 = vpop.f32.mrb[0].mxu0
      %v625 = vpop.f32.mrb[0].mxu0
      %v626 = vadd.f32 0.0, %v625
      %v627 = vpop.f32.mrb[0].mxu0
      %628 = vmatprep.mubr.bf16.mxu0 0
      %629 = vmatmul.mubr.bf16.gmra.mrb[0].mxu0 %v550
      %v630 = vpop.f32.mrb[0].mxu0
      %v631 = vadd.f32 0.0, %v630
      %v632 = vpop.f32.mrb[0].mxu0
      %v633 = vpop.f32.mrb[0].mxu0
      %v634 = vadd.f32 0.0, %v633
      %v635 = vpop.f32.mrb[0].mxu0
      %636 = vdwg.mxu0
      %v637 = vld [vmem:[%s4] sm:$0x1]
      %639 = vset.pattern.permute.xlu0 0
      %640 = vperm.xlu0 %639, %v510
      %v641 = vpop.permute.xlu0 %640
      %644 = vset.pattern.permute.xlu0 0
      %645 = vperm.xlu0 %644, 1.0
      %v646 = vpop.permute.xlu0 %645
      %649 = vset.pattern.permute.xlu0 0
      %650 = vperm.xlu0 %649, %v515
      %v651 = vpop.permute.xlu0 %650
      %v653 = vmul.f32 %v637, %v641
      %v654 = vmul.f32 %v637, %v646
      %v655 = vmul.f32 %v637, %v651
      %v659 = vlaneseq
      %v660 = vshrl.u32 %v659, 7
      %v661 = vsub.s32 0, %v660
      %v662 = vrot.slane %v653, %v661
      %v663 = vlaneseq
      %v664 = vshrl.u32 %v663, 7
      %v665 = vsub.s32 0, %v664
      %v666 = vrot.slane %v654, %v665
      %v667 = vlaneseq
      %v668 = vshrl.u32 %v667, 7
      %v669 = vsub.s32 0, %v668
      %v670 = vrot.slane %v655, %v669
      %v674 = vadd.f32 %v591, %v662
      %v675 = vadd.f32 %v594, %v662
      %v676 = vadd.f32 %v599, %v666
      %v677 = vadd.f32 %v602, %v666
      %v678 = vadd.f32 %v607, %v666
      %v679 = vadd.f32 %v610, %v666
      %v680 = vadd.f32 %v615, %v666
      %v681 = vadd.f32 %v618, %v666
      %v682 = vadd.f32 %v623, %v666
      %v683 = vadd.f32 %v626, %v666
      %v684 = vadd.f32 %v631, %v670
      %v685 = vadd.f32 %v634, %v670
      %v686 = vlaneseq
      %v687 = vshrl.u32 %v686, 7
      %v688 = vadd.s32 %v687, 8
      %v689 = vld [vmem:[%s6] sm:$0x1]
      %v691 = vlaneseq
      %v692 = vshrl.u32 %v691, 7
      %v693 = vsub.s32 0, %v692
      %v694 = vrot.slane %v689, %v693
      %v696 = vrot.slane %v674, 7
      %v697 = vrot.slane %v676, 7
      %v698 = vrot.slane %v678, 7
      %v699 = vrot.slane %v680, 7
      %v700 = vrot.slane %v682, 7
      %v701 = vrot.slane %v684, 7
      %v702 = vrot.slane %v675, 7
      %v703 = vrot.slane %v677, 7
      %v704 = vrot.slane %v679, 7
      %v705 = vrot.slane %v681, 7
      %v706 = vrot.slane %v683, 7
      %v707 = vrot.slane %v685, 7
      %vm708 = vcmp.lt.s32.totalorder %v687, 1
      %v709 = vsel %vm708, %v696, %v702
      %v710 = vsel %vm708, %v697, %v703
      %v711 = vsel %vm708, %v698, %v704
      %v712 = vsel %vm708, %v699, %v705
      %v713 = vsel %vm708, %v700, %v706
      %v714 = vsel %vm708, %v701, %v707
      %v715 = vsel %vm708, %v702, %v696
      %v716 = vsel %vm708, %v703, %v697
      %v717 = vsel %vm708, %v704, %v698
      %v718 = vsel %vm708, %v705, %v699
      %v719 = vsel %vm708, %v706, %v700
      %v720 = vsel %vm708, %v707, %v701
      %v721 = vrot.slane %v674, 1
      %v722 = vrot.slane %v676, 1
      %v723 = vrot.slane %v678, 1
      %v724 = vrot.slane %v680, 1
      %v725 = vrot.slane %v682, 1
      %v726 = vrot.slane %v684, 1
      %v727 = vrot.slane %v675, 1
      %v728 = vrot.slane %v677, 1
      %v729 = vrot.slane %v679, 1
      %v730 = vrot.slane %v681, 1
      %v731 = vrot.slane %v683, 1
      %v732 = vrot.slane %v685, 1
      %vm733 = vcmp.lt.s32.totalorder %v687, 7
      %v734 = vsel %vm733, %v721, %v727
      %v735 = vsel %vm733, %v722, %v728
      %v736 = vsel %vm733, %v723, %v729
      %v737 = vsel %vm733, %v724, %v730
      %v738 = vsel %vm733, %v725, %v731
      %v739 = vsel %vm733, %v726, %v732
      %v740 = vsel %vm733, %v727, %v721
      %v741 = vsel %vm733, %v728, %v722
      %v742 = vsel %vm733, %v729, %v723
      %v743 = vsel %vm733, %v730, %v724
      %v744 = vsel %vm733, %v731, %v725
      %v745 = vsel %vm733, %v732, %v726
      %vm746 = vcmp.eq.s32.totalorder %v687, 0
      %vm747 = vcmp.eq.s32.totalorder %v688, 0
      %v748 = vsel %vm746, 1, 0
      %v749 = vsel %vm747, 1, 0
      %vm750 = vcmp.eq.s32.totalorder %v748, 1
      %vm751 = vcmp.eq.s32.totalorder %v749, 1
      %v752 = vsel %vm750, 0.0, %v715
      %v753 = vsel %vm751, 0.0, %v709
      %v754 = vsel %vm750, 0.0, %v716
      %v755 = vsel %vm751, 0.0, %v710
      %v756 = vsel %vm750, 0.0, %v717
      %v757 = vsel %vm751, 0.0, %v711
      %v758 = vsel %vm750, 0.0, %v718
      %v759 = vsel %vm751, 0.0, %v712
      %v760 = vsel %vm750, 0.0, %v719
      %v761 = vsel %vm751, 0.0, %v713
      %v762 = vsel %vm750, 0.0, %v720
      %v763 = vsel %vm751, 0.0, %v714
      %vm764 = vcmp.eq.s32.totalorder %v687, 15
      %vm765 = vcmp.eq.s32.totalorder %v688, 15
      %v766 = vsel %vm764, 1, 0
      %v767 = vsel %vm765, 1, 0
      %vm768 = vcmp.eq.s32.totalorder %v766, 1
      %vm769 = vcmp.eq.s32.totalorder %v767, 1
      %v770 = vsel %vm768, 0.0, %v734
      %v771 = vsel %vm769, 0.0, %v740
      %v772 = vsel %vm768, 0.0, %v735
      %v773 = vsel %vm769, 0.0, %v741
      %v774 = vsel %vm768, 0.0, %v736
      %v775 = vsel %vm769, 0.0, %v742
      %v776 = vsel %vm768, 0.0, %v737
      %v777 = vsel %vm769, 0.0, %v743
      %v778 = vsel %vm768, 0.0, %v738
      %v779 = vsel %vm769, 0.0, %v744
      %v780 = vsel %vm768, 0.0, %v739
      %v781 = vsel %vm769, 0.0, %v745
      %v782 = vld [vmem:[%s5] sm:$0x1]
      %v783 = vlaneseq
      %v784 = vshrl.u32 %v783, 7
      %v785 = vsub.s32 0, %v784
      %v786 = vrot.slane %v782, %v785
      %v787 = vmul.f32 %v752, %v786
      %v788 = vmul.f32 %v753, %v786
      %v789 = vmul.f32 %v754, %v786
      %v790 = vmul.f32 %v755, %v786
      %v791 = vmul.f32 %v756, %v786
      %v792 = vmul.f32 %v757, %v786
      %v793 = vmul.f32 %v758, %v786
      %v794 = vmul.f32 %v759, %v786
      %v795 = vadd.f32 %v694, %v787
      %v796 = vadd.f32 %v694, %v788
      %v797 = vadd.f32 %v694, %v789
      %v798 = vadd.f32 %v694, %v790
      %v799 = vadd.f32 %v694, %v791
      %v800 = vadd.f32 %v694, %v792
      %v801 = vadd.f32 %v694, %v793
      %v802 = vadd.f32 %v694, %v794
      %v803 = vld [vmem:[%s5 + $0x1] sm:$0x1]
      %v804 = vlaneseq
      %v805 = vshrl.u32 %v804, 7
      %v806 = vsub.s32 0, %v805
      %v807 = vrot.slane %v803, %v806
      %v808 = vmul.f32 %v674, %v807
      %v809 = vmul.f32 %v675, %v807
      %v810 = vmul.f32 %v676, %v807
      %v811 = vmul.f32 %v677, %v807
      %v812 = vmul.f32 %v678, %v807
      %v813 = vmul.f32 %v679, %v807
      %v814 = vmul.f32 %v680, %v807
      %v815 = vmul.f32 %v681, %v807
      %v816 = vadd.f32 %v795, %v808
      %v817 = vadd.f32 %v796, %v809
      %v818 = vadd.f32 %v797, %v810
      %v819 = vadd.f32 %v798, %v811
      %v820 = vadd.f32 %v799, %v812
      %v821 = vadd.f32 %v800, %v813
      %v822 = vadd.f32 %v801, %v814
      %v823 = vadd.f32 %v802, %v815
      %v824 = vld [vmem:[%s5 + $0x2] sm:$0x1]
      %v825 = vlaneseq
      %v826 = vshrl.u32 %v825, 7
      %v827 = vsub.s32 0, %v826
      %v828 = vrot.slane %v824, %v827
      %v829 = vmul.f32 %v770, %v828
      %v830 = vmul.f32 %v771, %v828
      %v831 = vmul.f32 %v772, %v828
      %v832 = vmul.f32 %v773, %v828
      %v833 = vmul.f32 %v774, %v828
      %v834 = vmul.f32 %v775, %v828
      %v835 = vmul.f32 %v776, %v828
      %v836 = vmul.f32 %v777, %v828
      %v837 = vadd.f32 %v816, %v829
      %v838 = vadd.f32 %v817, %v830
      %v839 = vadd.f32 %v818, %v831
      %v840 = vadd.f32 %v819, %v832
      %v841 = vadd.f32 %v820, %v833
      %v842 = vadd.f32 %v821, %v834
      %v843 = vadd.f32 %v822, %v835
      %v844 = vadd.f32 %v823, %v836
      %s845 = scalar_lea.vmem %s5, 4
      %v846 = vld [vmem:[%s845] sm:$0x1]
      %v847 = vlaneseq
      %v848 = vshrl.u32 %v847, 7
      %v849 = vsub.s32 0, %v848
      %v850 = vrot.slane %v846, %v849
      %v851 = vmul.f32 %v754, %v850
      %v852 = vmul.f32 %v755, %v850
      %v853 = vmul.f32 %v756, %v850
      %v854 = vmul.f32 %v757, %v850
      %v855 = vmul.f32 %v758, %v850
      %v856 = vmul.f32 %v759, %v850
      %v857 = vmul.f32 %v760, %v850
      %v858 = vmul.f32 %v761, %v850
      %v859 = vadd.f32 %v837, %v851
      %v860 = vadd.f32 %v838, %v852
      %v861 = vadd.f32 %v839, %v853
      %v862 = vadd.f32 %v840, %v854
      %v863 = vadd.f32 %v841, %v855
      %v864 = vadd.f32 %v842, %v856
      %v865 = vadd.f32 %v843, %v857
      %v866 = vadd.f32 %v844, %v858
      %v867 = vld [vmem:[%s845 + $0x1] sm:$0x1]
      %v868 = vlaneseq
      %v869 = vshrl.u32 %v868, 7
      %v870 = vsub.s32 0, %v869
      %v871 = vrot.slane %v867, %v870
      %v872 = vmul.f32 %v676, %v871
      %v873 = vmul.f32 %v677, %v871
      %v874 = vmul.f32 %v678, %v871
      %v875 = vmul.f32 %v679, %v871
      %v876 = vmul.f32 %v680, %v871
      %v877 = vmul.f32 %v681, %v871
      %v878 = vmul.f32 %v682, %v871
      %v879 = vmul.f32 %v683, %v871
      %v880 = vadd.f32 %v859, %v872
      %v881 = vadd.f32 %v860, %v873
      %v882 = vadd.f32 %v861, %v874
      %v883 = vadd.f32 %v862, %v875
      %v884 = vadd.f32 %v863, %v876
      %v885 = vadd.f32 %v864, %v877
      %v886 = vadd.f32 %v865, %v878
      %v887 = vadd.f32 %v866, %v879
      %v888 = vld [vmem:[%s845 + $0x2] sm:$0x1]
      %v889 = vlaneseq
      %v890 = vshrl.u32 %v889, 7
      %v891 = vsub.s32 0, %v890
      %v892 = vrot.slane %v888, %v891
      %v893 = vmul.f32 %v772, %v892
      %v894 = vmul.f32 %v773, %v892
      %v895 = vmul.f32 %v774, %v892
      %v896 = vmul.f32 %v775, %v892
      %v897 = vmul.f32 %v776, %v892
      %v898 = vmul.f32 %v777, %v892
      %v899 = vmul.f32 %v778, %v892
      %v900 = vmul.f32 %v779, %v892
      %v901 = vadd.f32 %v880, %v893
      %v902 = vadd.f32 %v881, %v894
      %v903 = vadd.f32 %v882, %v895
      %v904 = vadd.f32 %v883, %v896
      %v905 = vadd.f32 %v884, %v897
      %v906 = vadd.f32 %v885, %v898
      %v907 = vadd.f32 %v886, %v899
      %v908 = vadd.f32 %v887, %v900
      %s909 = scalar_lea.vmem %s5, 8
      %v910 = vld [vmem:[%s909] sm:$0x1]
      %v911 = vlaneseq
      %v912 = vshrl.u32 %v911, 7
      %v913 = vsub.s32 0, %v912
      %v914 = vrot.slane %v910, %v913
      %v915 = vmul.f32 %v756, %v914
      %v916 = vmul.f32 %v757, %v914
      %v917 = vmul.f32 %v758, %v914
      %v918 = vmul.f32 %v759, %v914
      %v919 = vmul.f32 %v760, %v914
      %v920 = vmul.f32 %v761, %v914
      %v921 = vmul.f32 %v762, %v914
      %v922 = vmul.f32 %v763, %v914
      %v923 = vadd.f32 %v901, %v915
      %v924 = vadd.f32 %v902, %v916
      %v925 = vadd.f32 %v903, %v917
      %v926 = vadd.f32 %v904, %v918
      %v927 = vadd.f32 %v905, %v919
      %v928 = vadd.f32 %v906, %v920
      %v929 = vadd.f32 %v907, %v921
      %v930 = vadd.f32 %v908, %v922
      %v931 = vld [vmem:[%s909 + $0x1] sm:$0x1]
      %v932 = vlaneseq
      %v933 = vshrl.u32 %v932, 7
      %v934 = vsub.s32 0, %v933
      %v935 = vrot.slane %v931, %v934
      %v936 = vmul.f32 %v678, %v935
      %v937 = vmul.f32 %v679, %v935
      %v938 = vmul.f32 %v680, %v935
      %v939 = vmul.f32 %v681, %v935
      %v940 = vmul.f32 %v682, %v935
      %v941 = vmul.f32 %v683, %v935
      %v942 = vmul.f32 %v684, %v935
      %v943 = vmul.f32 %v685, %v935
      %v944 = vadd.f32 %v923, %v936
      %v945 = vadd.f32 %v924, %v937
      %v946 = vadd.f32 %v925, %v938
      %v947 = vadd.f32 %v926, %v939
      %v948 = vadd.f32 %v927, %v940
      %v949 = vadd.f32 %v928, %v941
      %v950 = vadd.f32 %v929, %v942
      %v951 = vadd.f32 %v930, %v943
      %v952 = vld [vmem:[%s909 + $0x2] sm:$0x1]
      %v953 = vlaneseq
      %v954 = vshrl.u32 %v953, 7
      %v955 = vsub.s32 0, %v954
      %v956 = vrot.slane %v952, %v955
      %v957 = vmul.f32 %v774, %v956
      %v958 = vmul.f32 %v775, %v956
      %v959 = vmul.f32 %v776, %v956
      %v960 = vmul.f32 %v777, %v956
      %v961 = vmul.f32 %v778, %v956
      %v962 = vmul.f32 %v779, %v956
      %v963 = vmul.f32 %v780, %v956
      %v964 = vmul.f32 %v781, %v956
      %v965 = vadd.f32 %v944, %v957
      %v966 = vadd.f32 %v945, %v958
      %v967 = vadd.f32 %v946, %v959
      %v968 = vadd.f32 %v947, %v960
      %v969 = vadd.f32 %v948, %v961
      %v970 = vadd.f32 %v949, %v962
      %v971 = vadd.f32 %v950, %v963
      %v972 = vadd.f32 %v951, %v964
      %v973 = vmul.f32 %v965, 0.5
      %v974 = vmul.f32 %v966, 0.5
      %v975 = vmul.f32 %v967, 0.5
      %v976 = vmul.f32 %v968, 0.5
      %v977 = vmul.f32 %v969, 0.5
      %v978 = vmul.f32 %v970, 0.5
      %v979 = vmul.f32 %v971, 0.5
      %v980 = vmul.f32 %v972, 0.5
      %v981 = vmul.f32 %v965, 0.70710677
      %v982 = vmul.f32 %v966, 0.70710677
      %v983 = vmul.f32 %v967, 0.70710677
      %v984 = vmul.f32 %v968, 0.70710677
      %v985 = vmul.f32 %v969, 0.70710677
      %v986 = vmul.f32 %v970, 0.70710677
      %v987 = vmul.f32 %v971, 0.70710677
      %v988 = vmul.f32 %v972, 0.70710677
      %v989 = verf.f32.pop %v981
      %v990 = verf.f32.pop %v982
      %v991 = verf.f32.pop %v983
      %v992 = verf.f32.pop %v984
      %v993 = verf.f32.pop %v985
      %v994 = verf.f32.pop %v986
      %v995 = verf.f32.pop %v987
      %v996 = verf.f32.pop %v988
      %v997 = vadd.f32 %v989, 1.0
      %v998 = vadd.f32 %v990, 1.0
      %v999 = vadd.f32 %v991, 1.0
      %v1000 = vadd.f32 %v992, 1.0
      %v1001 = vadd.f32 %v993, 1.0
      %v1002 = vadd.f32 %v994, 1.0
      %v1003 = vadd.f32 %v995, 1.0
      %v1004 = vadd.f32 %v996, 1.0
      %v1005 = vmul.f32 %v973, %v997
      %v1006 = vmul.f32 %v974, %v998
      %v1007 = vmul.f32 %v975, %v999
      %v1008 = vmul.f32 %v976, %v1000
      %v1009 = vmul.f32 %v977, %v1001
      %v1010 = vmul.f32 %v978, %v1002
      %v1011 = vmul.f32 %v979, %v1003
      %v1012 = vmul.f32 %v980, %v1004
      %1021 = vrot.lane.b32.xlu0 %v965, 120
      %v1022 = vpop.permute.xlu0 %1021
      %1023 = vrot.lane.b32.xlu0 %v966, 120
      %v1024 = vpop.permute.xlu0 %1023
      %1025 = vrot.lane.b32.xlu0 %v967, 120
      %v1026 = vpop.permute.xlu0 %1025
      %1027 = vrot.lane.b32.xlu0 %v968, 120
      %v1028 = vpop.permute.xlu0 %1027
      %1029 = vrot.lane.b32.xlu0 %v969, 120
      %v1030 = vpop.permute.xlu0 %1029
      %1031 = vrot.lane.b32.xlu0 %v970, 120
      %v1032 = vpop.permute.xlu0 %1031
      %1033 = vrot.lane.b32.xlu0 %v971, 120
      %v1034 = vpop.permute.xlu0 %1033
      %1035 = vrot.lane.b32.xlu0 %v972, 120
      %v1036 = vpop.permute.xlu0 %1035
      %v1045 = vmul.f32 %v1005, %v1022
      %v1046 = vmul.f32 %v1006, %v1024
      %v1047 = vmul.f32 %v1007, %v1026
      %v1048 = vmul.f32 %v1008, %v1028
      %v1049 = vmul.f32 %v1009, %v1030
      %v1050 = vmul.f32 %v1010, %v1032
      %v1051 = vmul.f32 %v1011, %v1034
      %v1052 = vmul.f32 %v1012, %v1036
      %v1053 = vpack.c.bf16 %v1046, %v1045
      %v1054 = vpack.c.bf16 %v1048, %v1047
      %v1055 = vpack.c.bf16 %v1050, %v1049
      %v1056 = vpack.c.bf16 %v1052, %v1051
      %v1057 = vld [vmem:[%s7] sm:$0xf]
      %v1058 = vld [vmem:[%s8] sm:$0x1]
      %v1060 = vlaneseq
      %v1061 = vshrl.u32 %v1060, 7
      %v1062 = vsub.s32 0, %v1061
      %v1063 = vrot.slane %v1058, %v1062
      %vm1065 = vcmask 64512
      %v1067 = vsel %vm1065, %v1053, 0
      %v1070 = vsel %vm1065, %v1054, 0
      %v1073 = vsel %vm1065, %v1055, 0
      %v1076 = vsel %vm1065, %v1056, 0
      %vm1078 = vcmask 1043456
      %v1080 = vsel %vm1078, %v1057, 0
      %1082 = vmatprep.subr.bf16.mxu0 0
      %1083 = vmatpush1.bf16.msra.mxu0 %v1080
      %1084 = vmatprep.subr.bf16.mxu0 0
      %1085 = vmatpush1.bf16.msra.mxu0 0
      %1086 = vmatprep.subr.bf16.mxu0 0
      %1087 = vmatpush1.bf16.msra.mxu0 0
      %1088 = vmatprep.subr.bf16.mxu0 0
      %1089 = vmatpush1.bf16.msra.mxu0 0
      %1090 = vmatprep.subr.bf16.mxu0 0
      %1091 = vmatpush1.bf16.msra.mxu0 0
      %1092 = vmatprep.subr.bf16.mxu0 0
      %1093 = vmatpush1.bf16.msra.mxu0 0
      %1094 = vmatprep.subr.bf16.mxu0 0
      %1095 = vmatpush1.bf16.msra.mxu0 0
      %1096 = vmatprep.subr.bf16.mxu0 0
      %1097 = vmatpush1.bf16.msra.mxu0 0
      %1098 = vmatprep.subr.bf16.mxu0 0
      %1099 = vmatpush1.bf16.msra.mxu0 0
      %1100 = vmatprep.subr.bf16.mxu0 0
      %1101 = vmatpush1.bf16.msra.mxu0 0
      %1102 = vmatprep.subr.bf16.mxu0 0
      %1103 = vmatpush1.bf16.msra.mxu0 0
      %1104 = vmatprep.subr.bf16.mxu0 0
      %1105 = vmatpush1.bf16.msra.mxu0 0
      %1106 = vmatprep.subr.bf16.mxu0 0
      %1107 = vmatpush1.bf16.msra.mxu0 0
      %1108 = vmatprep.subr.bf16.mxu0 0
      %1109 = vmatpush1.bf16.msra.mxu0 0
      %1110 = vmatprep.subr.bf16.mxu0 0
      %1111 = vmatpush1.bf16.msra.mxu0 0
      %1112 = vmatprep.subr.bf16.mxu0 0
      %1113 = vmatpush1.bf16.msra.mxu0 0
      %1114 = vmatprep.mubr.bf16.mxu0 0
      %1115 = vmatmul.mubr.bf16.gmra.mrb[0].mxu0 %v1067
      %v1116 = vpop.f32.mrb[0].mxu0
      %v1117 = vadd.f32 %v1063, %v1116
      %v1118 = vpop.f32.mrb[0].mxu0
      %v1119 = vpop.f32.mrb[0].mxu0
      %v1120 = vadd.f32 %v1063, %v1119
      %v1121 = vpop.f32.mrb[0].mxu0
      %1122 = vmatprep.mubr.bf16.mxu0 0
      %1123 = vmatmul.mubr.bf16.gmra.mrb[0].mxu0 %v1070
      %v1124 = vpop.f32.mrb[0].mxu0
      %v1125 = vadd.f32 %v1063, %v1124
      %v1126 = vpop.f32.mrb[0].mxu0
      %v1127 = vpop.f32.mrb[0].mxu0
      %v1128 = vadd.f32 %v1063, %v1127
      %v1129 = vpop.f32.mrb[0].mxu0
      %1130 = vmatprep.mubr.bf16.mxu0 0
      %1131 = vmatmul.mubr.bf16.gmra.mrb[0].mxu0 %v1073
      %v1132 = vpop.f32.mrb[0].mxu0
      %v1133 = vadd.f32 %v1063, %v1132
      %v1134 = vpop.f32.mrb[0].mxu0
      %v1135 = vpop.f32.mrb[0].mxu0
      %v1136 = vadd.f32 %v1063, %v1135
      %v1137 = vpop.f32.mrb[0].mxu0
      %1138 = vmatprep.mubr.bf16.mxu0 0
      %1139 = vmatmul.mubr.bf16.gmra.mrb[0].mxu0 %v1076
      %v1140 = vpop.f32.mrb[0].mxu0
      %v1141 = vadd.f32 %v1063, %v1140
      %v1142 = vpop.f32.mrb[0].mxu0
      %v1143 = vpop.f32.mrb[0].mxu0
      %v1144 = vadd.f32 %v1063, %v1143
      %v1145 = vpop.f32.mrb[0].mxu0
      %1146 = vdwg.mxu0
      %1147 = vst.msk [vmem:[%s499] sm:$0xff] %vm533, %v1117
      %1148 = vst.msk [vmem:[%s499 + $0x8] sm:$0xff] %vm533, %v1120
      %1149 = vst.msk [vmem:[%s499 + $0x10] sm:$0xff] %vm533, %v1125
      %1150 = vst.msk [vmem:[%s499 + $0x18] sm:$0xff] %vm533, %v1128
      %1151 = vst.msk [vmem:[%s499 + $0x20] sm:$0xff] %vm533, %v1133
      %1152 = vst.msk [vmem:[%s499 + $0x28] sm:$0xff] %vm533, %v1136
      %1153 = vst.msk [vmem:[%s499 + $0x30] sm:$0xff] %vm533, %v1141
      %1154 = vst.msk [vmem:[%s499 + $0x38] sm:$0xff] %vm533, %v1144
      %s1155 = smul.u32 4, %s25
      %p1156 = scmp.lt.s32.totalorder %s24, 1
      %s1157 = scalar_select %p1156, %s24, 1
      %p1158 = scmp.lt.s32.totalorder %s1155, 15
      %s1159 = scalar_select %p1158, %s1155, 15
      %s1160 = smul.addr %s1159, 2
      %s1161 = smul.addr %s1157, 32
      %s1162 = sadd.s32 %s1160, %s1161
      %s1163 = smul.addr %s1162, 8
      %s1164 = scalar_lea.vmem %s9, %s1163
      // Predicated region
      $region57: #{tpu_custom_call.1} parent=55 // pred_check
        %p1165 = pneg %p278
      $region58: #{tpu_custom_call.1} parent=55 // pred_check_branch
        %1167 = sbr.rel (%p1165) target = $region60
      $region59: #{tpu_custom_call.1} parent=55 // pred_region
        %s1168 = smul.u32 4, %s25
      $region60: #{tpu_custom_call.1} parent=55 // pred_fallthru
        _
    $region56: #{tpu_custom_call.1} parent=5 // pred_fallthru
      _
    %p1169 = scmp.le.s32.totalorder 2, %s15
    // Predicated region
    $region61: #{tpu_custom_call.1} parent=5 // pred_check
      %p1170 = pneg %p1169
    $region62: #{tpu_custom_call.1} parent=5 // pred_check_branch
      %1172 = sbr.rel (%p1170) target = $region64
    $region63: #{tpu_custom_call.1} parent=5 // pred_region
      %s1173 = ssub.s32 %s15, 2
      // Predicated region
      $region65: #{tpu_custom_call.1} parent=63 // pred_check
        %p1174 = pneg %p284
      $region66: #{tpu_custom_call.1} parent=63 // pred_check_branch
        %1176 = sbr.rel (%p1174) target = $region68
      $region67: #{tpu_custom_call.1} parent=63 // pred_region
        %s1177 = smul.u32 4, %s27
        %p1178 = scmp.lt.s32.totalorder %s26, 1
        %s1179 = scalar_select %p1178, %s26, 1
        %p1180 = scmp.lt.s32.totalorder %s1177, 15
        %s1181 = scalar_select %p1180, %s1177, 15
        %s1182 = smul.addr %s1181, 2
        %s1183 = smul.addr %s1179, 32
        %s1184 = sadd.s32 %s1182, %s1183
        %s1185 = smul.addr %s1184, 8
        %s1186 = scalar_lea.vmem %s9, %s1185
      $region68: #{tpu_custom_call.1} parent=63 // pred_fallthru
        _
    $region64: #{tpu_custom_call.1} parent=5 // pred_fallthru
      _
  $region6: #{tpu_custom_call.1} parent=0 // loop_footer
    %s19 = sadd.s32 1, %s15
  $region7: #{tpu_custom_call.1} parent=0 // loop_footer_branch
    %14 = sbr.rel target = $region3
  $region8: #{tpu_custom_call.1} parent=0 // loop_exit
    _

// kernel: tpu_custom_call.1
$region0: #{tpu_custom_call.1}
  #allocation0 [shape = 'u32[]', space=smem, size = 0x4, offset = 0x4, fixed_abs, tag = 'smem constant byte address 0x4 - core index']
  #allocation1 [shape = 'u32[144,128]{1,0:T(1,128)}', space=vmem, size = 0x12000, scoped, tag = 'internal scratch']
  %s0 = inlined_call_operand.vmem [shape: f32[2,16,16,4], index: 0, kind: input, shape index: {}]
  %s1 = inlined_call_operand.vmem [shape: f32[2,16,16,4], index: 1, kind: input, shape index: {}]
  %s2 = inlined_call_operand.vmem [shape: f32[2,16,16,4], index: 2, kind: input, shape index: {}]
  %s3 = inlined_call_operand.vmem [shape: bf16[4,16], index: 3, kind: input, shape index: {}]
  %s4 = inlined_call_operand.vmem [shape: f32[1,16], index: 4, kind: input, shape index: {}]
  %s5 = inlined_call_operand.vmem [shape: f32[3,3,16], index: 5, kind: input, shape index: {}]
  %s6 = inlined_call_operand.vmem [shape: f32[1,16], index: 6, kind: input, shape index: {}]
  %s7 = inlined_call_operand.vmem [shape: bf16[8,4], index: 7, kind: input, shape index: {}]
  %s8 = inlined_call_operand.vmem [shape: f32[1,4], index: 8, kind: input, shape index: {}]
  %s9 = inlined_call_operand.vmem [shape: f32[2,16,16,4], index: 9, kind: output, shape index: {}]
  %s10 = sld [smem:[#allocation0]]
  $region69: #{tpu_custom_call.1} parent=0
    _
  %s12 = ssub.s32 1, %s10
  %s13 = scalar_select 0, %s12, %s10
  loop: start=0, step=1, limit=10
  $region2: #{tpu_custom_call.1} parent=0 // loop_pre_header
    _
  $region3: #{tpu_custom_call.1} parent=0 // loop_header
    %s15 = sphi 0, %s19
    %p16 = scmp.ge.s32.totalorder %s15, 10
    %s22 = sphi 0, %s34
    %s23 = sphi 0, %s30
    %s24 = sphi 0, %s22
    %s25 = sphi 0, %s23
    %s26 = sphi 0, %s24
    %s27 = sphi 0, %s25
    %s39 = sphi 0, %s41
    %s42 = sphi 0, %s39
    %s43 = sphi 0, %s42
    %s59 = sphi 0, %s43
    %s75 = sphi 0, %s77
    %s78 = sphi 0, %s75
    %s79 = sphi 0, %s78
    %s95 = sphi 0, %s79
    %s111 = sphi 0, %s113
    %s114 = sphi 0, %s111
    %s115 = sphi 0, %s114
    %s131 = sphi 0, %s115
    %s135 = sphi 0, %s135
    %s137 = sphi 0, %s135
    %s138 = sphi 0, %s137
    %s152 = sphi 0, %s138
    %s156 = sphi 0, %s156
    %s158 = sphi 0, %s156
    %s159 = sphi 0, %s158
    %s173 = sphi 0, %s159
    %s177 = sphi 0, %s177
    %s179 = sphi 0, %s177
    %s180 = sphi 0, %s179
    %s194 = sphi 0, %s180
    %s198 = sphi 0, %s198
    %s200 = sphi 0, %s198
    %s201 = sphi 0, %s200
    %s215 = sphi 0, %s201
    %s219 = sphi 0, %s219
    %s221 = sphi 0, %s219
    %s222 = sphi 0, %s221
    %s236 = sphi 0, %s222
    %s240 = sphi 0, %s240
    %s242 = sphi 0, %s240
    %s243 = sphi 0, %s242
    %s257 = sphi 0, %s243
    %s265 = sphi 0, %s267
    %s268 = sphi 0, %s265
    %s269 = sphi 0, %s268
    %s285 = sphi 0, %s269
  $region4: #{tpu_custom_call.1} parent=0 // loop_header_branch
    %18 = sbr.rel (%p16) target = $region8
  $region5: #{tpu_custom_call.1} parent=0 // loop_body
    %s20 = ssub.s32 %s15, 1
    %s21 = ssub.s32 %s15, 2
    %s28 = sadd.s32 1, %s23
    %p29 = scmp.ge.s32.totalorder %s28, 4
    %s30 = scalar_select %p29, 0, %s28
    %s31 = sadd.s32 1, %s22
    %s32 = scalar_select %p29, %s31, %s22
    %p33 = scmp.ge.s32.totalorder %s32, 2
    %s34 = scalar_select %p33, 0, %s32
    %s35 = ssub.s32 %s22, %s34
    %s36 = ssub.s32 %s23, %s30
    %s37 = sor.u32 %s35, %s36
    %p38 = scmp.eq.s32.totalorder %s37, 0
    %s40 = sadd.s32 %s39, 1
    %s41 = scalar_select %p38, %s39, %s40
    %p44 = pneg %p38
    %p45 = scmp.eq.s32.totalorder %s15, 7
    %p46 = por %p44, %p45
    %p47 = scmp.ne.s32.totalorder %s39, %s42
    %p48 = scmp.eq.s32.totalorder %s15, 0
    %p49 = por %p47, %p48
    %p50 = scmp.ne.s32.totalorder %s39, %s42
    %p51 = scmp.eq.s32.totalorder %s20, 7
    %p52 = por %p50, %p51
    %p53 = scmp.ne.s32.totalorder %s42, %s43
    %p54 = scmp.eq.s32.totalorder %s20, 0
    %p55 = por %p53, %p54
    %p56 = scmp.ne.s32.totalorder %s42, %s43
    %p57 = scmp.eq.s32.totalorder %s21, 7
    %p58 = por %p56, %p57
    %p60 = scmp.ne.s32.totalorder %s43, %s59
    %p61 = scmp.eq.s32.totalorder %s21, 0
    %p62 = por %p60, %p61
    %s63 = smul.u32 %s23, 4
    %s64 = ssub.s32 %s63, 1
    %p65 = scmp.gt.s32.totalorder %s64, 0
    %s66 = scalar_select %p65, %s64, 0
    %s67 = smul.u32 %s30, 4
    %s68 = ssub.s32 %s67, 1
    %p69 = scmp.gt.s32.totalorder %s68, 0
    %s70 = scalar_select %p69, %s68, 0
    %s71 = ssub.s32 %s22, %s34
    %s72 = ssub.s32 %s66, %s70
    %s73 = sor.u32 %s71, %s72
    %p74 = scmp.eq.s32.totalorder %s73, 0
    %s76 = sadd.s32 %s75, 1
    %s77 = scalar_select %p74, %s75, %s76
    %p80 = pneg %p74
    %p81 = scmp.eq.s32.totalorder %s15, 7
    %p82 = por %p80, %p81
    %p83 = scmp.ne.s32.totalorder %s75, %s78
    %p84 = scmp.eq.s32.totalorder %s15, 0
    %p85 = por %p83, %p84
    %p86 = scmp.ne.s32.totalorder %s75, %s78
    %p87 = scmp.eq.s32.totalorder %s20, 7
    %p88 = por %p86, %p87
    %p89 = scmp.ne.s32.totalorder %s78, %s79
    %p90 = scmp.eq.s32.totalorder %s20, 0
    %p91 = por %p89, %p90
    %p92 = scmp.ne.s32.totalorder %s78, %s79
    %p93 = scmp.eq.s32.totalorder %s21, 7
    %p94 = por %p92, %p93
    %p96 = scmp.ne.s32.totalorder %s79, %s95
    %p97 = scmp.eq.s32.totalorder %s21, 0
    %p98 = por %p96, %p97
    %s99 = smul.u32 %s23, 4
    %s100 = sadd.s32 %s99, 4
    %p101 = scmp.lt.s32.totalorder %s100, 15
    %s102 = scalar_select %p101, %s100, 15
    %s103 = smul.u32 %s30, 4
    %s104 = sadd.s32 %s103, 4
    %p105 = scmp.lt.s32.totalorder %s104, 15
    %s106 = scalar_select %p105, %s104, 15
    %s107 = ssub.s32 %s22, %s34
    %s108 = ssub.s32 %s102, %s106
    %s109 = sor.u32 %s107, %s108
    %p110 = scmp.eq.s32.totalorder %s109, 0
    %s112 = sadd.s32 %s111, 1
    %s113 = scalar_select %p110, %s111, %s112
    %p116 = pneg %p110
    %p117 = scmp.eq.s32.totalorder %s15, 7
    %p118 = por %p116, %p117
    %p119 = scmp.ne.s32.totalorder %s111, %s114
    %p120 = scmp.eq.s32.totalorder %s15, 0
    %p121 = por %p119, %p120
    %p122 = scmp.ne.s32.totalorder %s111, %s114
    %p123 = scmp.eq.s32.totalorder %s20, 7
    %p124 = por %p122, %p123
    %p125 = scmp.ne.s32.totalorder %s114, %s115
    %p126 = scmp.eq.s32.totalorder %s20, 0
    %p127 = por %p125, %p126
    %p128 = scmp.ne.s32.totalorder %s114, %s115
    %p129 = scmp.eq.s32.totalorder %s21, 7
    %p130 = por %p128, %p129
    %p132 = scmp.ne.s32.totalorder %s115, %s131
    %p133 = scmp.eq.s32.totalorder %s21, 0
    %p134 = por %p132, %p133
    %s136 = sadd.s32 %s135, 1
    %p139 = scmp.eq.s32.totalorder %s15, 7
    %p140 = scmp.ne.s32.totalorder %s135, %s137
    %p141 = scmp.eq.s32.totalorder %s15, 0
    %p142 = por %p140, %p141
    %p143 = scmp.ne.s32.totalorder %s135, %s137
    %p144 = scmp.eq.s32.totalorder %s20, 7
    %p145 = por %p143, %p144
    %p146 = scmp.ne.s32.totalorder %s137, %s138
    %p147 = scmp.eq.s32.totalorder %s20, 0
    %p148 = por %p146, %p147
    %p149 = scmp.ne.s32.totalorder %s137, %s138
    %p150 = scmp.eq.s32.totalorder %s21, 7
    %p151 = por %p149, %p150
    %p153 = scmp.ne.s32.totalorder %s138, %s152
    %p154 = scmp.eq.s32.totalorder %s21, 0
    %p155 = por %p153, %p154
    %s157 = sadd.s32 %s156, 1
    %p160 = scmp.eq.s32.totalorder %s15, 7
    %p161 = scmp.ne.s32.totalorder %s156, %s158
    %p162 = scmp.eq.s32.totalorder %s15, 0
    %p163 = por %p161, %p162
    %p164 = scmp.ne.s32.totalorder %s156, %s158
    %p165 = scmp.eq.s32.totalorder %s20, 7
    %p166 = por %p164, %p165
    %p167 = scmp.ne.s32.totalorder %s158, %s159
    %p168 = scmp.eq.s32.totalorder %s20, 0
    %p169 = por %p167, %p168
    %p170 = scmp.ne.s32.totalorder %s158, %s159
    %p171 = scmp.eq.s32.totalorder %s21, 7
    %p172 = por %p170, %p171
    %p174 = scmp.ne.s32.totalorder %s159, %s173
    %p175 = scmp.eq.s32.totalorder %s21, 0
    %p176 = por %p174, %p175
    %s178 = sadd.s32 %s177, 1
    %p181 = scmp.eq.s32.totalorder %s15, 7
    %p182 = scmp.ne.s32.totalorder %s177, %s179
    %p183 = scmp.eq.s32.totalorder %s15, 0
    %p184 = por %p182, %p183
    %p185 = scmp.ne.s32.totalorder %s177, %s179
    %p186 = scmp.eq.s32.totalorder %s20, 7
    %p187 = por %p185, %p186
    %p188 = scmp.ne.s32.totalorder %s179, %s180
    %p189 = scmp.eq.s32.totalorder %s20, 0
    %p190 = por %p188, %p189
    %p191 = scmp.ne.s32.totalorder %s179, %s180
    %p192 = scmp.eq.s32.totalorder %s21, 7
    %p193 = por %p191, %p192
    %p195 = scmp.ne.s32.totalorder %s180, %s194
    %p196 = scmp.eq.s32.totalorder %s21, 0
    %p197 = por %p195, %p196
    %s199 = sadd.s32 %s198, 1
    %p202 = scmp.eq.s32.totalorder %s15, 7
    %p203 = scmp.ne.s32.totalorder %s198, %s200
    %p204 = scmp.eq.s32.totalorder %s15, 0
    %p205 = por %p203, %p204
    %p206 = scmp.ne.s32.totalorder %s198, %s200
    %p207 = scmp.eq.s32.totalorder %s20, 7
    %p208 = por %p206, %p207
    %p209 = scmp.ne.s32.totalorder %s200, %s201
    %p210 = scmp.eq.s32.totalorder %s20, 0
    %p211 = por %p209, %p210
    %p212 = scmp.ne.s32.totalorder %s200, %s201
    %p213 = scmp.eq.s32.totalorder %s21, 7
    %p214 = por %p212, %p213
    %p216 = scmp.ne.s32.totalorder %s201, %s215
    %p217 = scmp.eq.s32.totalorder %s21, 0
    %p218 = por %p216, %p217
    %s220 = sadd.s32 %s219, 1
    %p223 = scmp.eq.s32.totalorder %s15, 7
    %p224 = scmp.ne.s32.totalorder %s219, %s221
    %p225 = scmp.eq.s32.totalorder %s15, 0
    %p226 = por %p224, %p225
    %p227 = scmp.ne.s32.totalorder %s219, %s221
    %p228 = scmp.eq.s32.totalorder %s20, 7
    %p229 = por %p227, %p228
    %p230 = scmp.ne.s32.totalorder %s221, %s222
    %p231 = scmp.eq.s32.totalorder %s20, 0
    %p232 = por %p230, %p231
    %p233 = scmp.ne.s32.totalorder %s221, %s222
    %p234 = scmp.eq.s32.totalorder %s21, 7
    %p235 = por %p233, %p234
    %p237 = scmp.ne.s32.totalorder %s222, %s236
    %p238 = scmp.eq.s32.totalorder %s21, 0
    %p239 = por %p237, %p238
    %s241 = sadd.s32 %s240, 1
    %p244 = scmp.eq.s32.totalorder %s15, 7
    %p245 = scmp.ne.s32.totalorder %s240, %s242
    %p246 = scmp.eq.s32.totalorder %s15, 0
    %p247 = por %p245, %p246
    %p248 = scmp.ne.s32.totalorder %s240, %s242
    %p249 = scmp.eq.s32.totalorder %s20, 7
    %p250 = por %p248, %p249
    %p251 = scmp.ne.s32.totalorder %s242, %s243
    %p252 = scmp.eq.s32.totalorder %s20, 0
    %p253 = por %p251, %p252
    %p254 = scmp.ne.s32.totalorder %s242, %s243
    %p255 = scmp.eq.s32.totalorder %s21, 7
    %p256 = por %p254, %p255
    %p258 = scmp.ne.s32.totalorder %s243, %s257
    %p259 = scmp.eq.s32.totalorder %s21, 0
    %p260 = por %p258, %p259
    %s261 = ssub.s32 %s22, %s34
    %s262 = ssub.s32 %s23, %s30
    %s263 = sor.u32 %s261, %s262
    %p264 = scmp.eq.s32.totalorder %s263, 0
    %s266 = sadd.s32 %s265, 1
    %s267 = scalar_select %p264, %s265, %s266
    %p270 = pneg %p264
    %p271 = scmp.eq.s32.totalorder %s15, 7
    %p272 = por %p270, %p271
    %p273 = scmp.ne.s32.totalorder %s265, %s268
    %p274 = scmp.eq.s32.totalorder %s15, 0
    %p275 = por %p273, %p274
    %p276 = scmp.ne.s32.totalorder %s265, %s268
    %p277 = scmp.eq.s32.totalorder %s20, 7
    %p278 = por %p276, %p277
    %p279 = scmp.ne.s32.totalorder %s268, %s269
    %p280 = scmp.eq.s32.totalorder %s20, 0
    %p281 = por %p279, %p280
    %p282 = scmp.ne.s32.totalorder %s268, %s269
    %p283 = scmp.eq.s32.totalorder %s21, 7
    %p284 = por %p282, %p283
    %p286 = scmp.ne.s32.totalorder %s269, %s285
    %p287 = scmp.eq.s32.totalorder %s21, 0
    %p288 = por %p286, %p287
    %p289 = scmp.le.s32.totalorder 1, %s15
    %p290 = scmp.lt.s32.totalorder %s15, 9
    %p291 = pnand %p289, %p290
    %p292 = pneg %p291
    // Predicated region
    $region9: #{tpu_custom_call.1} parent=5 // pred_check
      _
    $region10: #{tpu_custom_call.1} parent=5 // pred_check_branch
      %294 = sbr.rel (%p291) target = $region12
    $region11: #{tpu_custom_call.1} parent=5 // pred_region
      %s295 = ssub.s32 %s15, 1
      // Predicated region
      $region13: #{tpu_custom_call.1} parent=11 // pred_check
        %p296 = pneg %p148
      $region14: #{tpu_custom_call.1} parent=11 // pred_check_branch
        %298 = sbr.rel (%p296) target = $region16
      $region15: #{tpu_custom_call.1} parent=11 // pred_region
        _
      $region16: #{tpu_custom_call.1} parent=11 // pred_fallthru
        _
      // Predicated region
      $region17: #{tpu_custom_call.1} parent=11 // pred_check
        %p299 = pneg %p169
      $region18: #{tpu_custom_call.1} parent=11 // pred_check_branch
        %301 = sbr.rel (%p299) target = $region20
      $region19: #{tpu_custom_call.1} parent=11 // pred_region
        _
      $region20: #{tpu_custom_call.1} parent=11 // pred_fallthru
        _
      // Predicated region
      $region21: #{tpu_custom_call.1} parent=11 // pred_check
        %p302 = pneg %p190
      $region22: #{tpu_custom_call.1} parent=11 // pred_check_branch
        %304 = sbr.rel (%p302) target = $region24
      $region23: #{tpu_custom_call.1} parent=11 // pred_region
        _
      $region24: #{tpu_custom_call.1} parent=11 // pred_fallthru
        _
      // Predicated region
      $region25: #{tpu_custom_call.1} parent=11 // pred_check
        %p305 = pneg %p211
      $region26: #{tpu_custom_call.1} parent=11 // pred_check_branch
        %307 = sbr.rel (%p305) target = $region28
      $region27: #{tpu_custom_call.1} parent=11 // pred_region
        _
      $region28: #{tpu_custom_call.1} parent=11 // pred_fallthru
        _
      // Predicated region
      $region29: #{tpu_custom_call.1} parent=11 // pred_check
        %p308 = pneg %p232
      $region30: #{tpu_custom_call.1} parent=11 // pred_check_branch
        %310 = sbr.rel (%p308) target = $region32
      $region31: #{tpu_custom_call.1} parent=11 // pred_region
        _
      $region32: #{tpu_custom_call.1} parent=11 // pred_fallthru
        _
      // Predicated region
      $region33: #{tpu_custom_call.1} parent=11 // pred_check
        %p311 = pneg %p253
      $region34: #{tpu_custom_call.1} parent=11 // pred_check_branch
        %313 = sbr.rel (%p311) target = $region36
      $region35: #{tpu_custom_call.1} parent=11 // pred_region
        _
      $region36: #{tpu_custom_call.1} parent=11 // pred_fallthru
        _
    $region12: #{tpu_custom_call.1} parent=5 // pred_fallthru
      _
    %p314 = scmp.lt.s32.totalorder %s15, 8
    // Predicated region
    $region37: #{tpu_custom_call.1} parent=5 // pred_check
      %p315 = pneg %p314
    $region38: #{tpu_custom_call.1} parent=5 // pred_check_branch
      %317 = sbr.rel (%p315) target = $region40
    $region39: #{tpu_custom_call.1} parent=5 // pred_region
      // Predicated region
      $region41: #{tpu_custom_call.1} parent=39 // pred_check
        %p318 = pneg %p49
      $region42: #{tpu_custom_call.1} parent=39 // pred_check_branch
        %320 = sbr.rel (%p318) target = $region44
      $region43: #{tpu_custom_call.1} parent=39 // pred_region
        %s321 = smul.u32 4, %s23
        %p322 = scmp.lt.s32.totalorder %s22, 1
        %s323 = scalar_select %p322, %s22, 1
        %p324 = scmp.lt.s32.totalorder %s321, 15
        %s325 = scalar_select %p324, %s321, 15
        %s326 = smul.addr %s325, 2
        %s327 = smul.addr %s323, 32
        %s328 = sadd.s32 %s326, %s327
        %s329 = smul.addr %s328, 8
        %s330 = scalar_lea.vmem %s0, %s329
        %s331 = smul.u32 4, %s23
      $region44: #{tpu_custom_call.1} parent=39 // pred_fallthru
        _
      // Predicated region
      $region45: #{tpu_custom_call.1} parent=39 // pred_check
        %p332 = pneg %p85
      $region46: #{tpu_custom_call.1} parent=39 // pred_check_branch
        %334 = sbr.rel (%p332) target = $region48
      $region47: #{tpu_custom_call.1} parent=39 // pred_region
        %s335 = smul.u32 %s23, 4
        %s336 = ssub.s32 %s335, 1
        %p337 = scmp.gt.s32.totalorder %s336, 0
        %s338 = scalar_select %p337, %s336, 0
        %p339 = scmp.lt.s32.totalorder %s22, 1
        %s340 = scalar_select %p339, %s22, 1
        %p341 = scmp.lt.s32.totalorder %s338, 15
        %s342 = scalar_select %p341, %s338, 15
        %s343 = smul.addr %s342, 2
        %s344 = smul.addr %s340, 32
        %s345 = sadd.s32 %s343, %s344
        %s346 = smul.addr %s345, 8
        %s347 = scalar_lea.vmem %s1, %s346
        %s348 = smul.u32 %s23, 4
        %s349 = ssub.s32 %s348, 1
        %p350 = scmp.gt.s32.totalorder %s349, 0
        %s351 = scalar_select %p350, %s349, 0
      $region48: #{tpu_custom_call.1} parent=39 // pred_fallthru
        _
      // Predicated region
      $region49: #{tpu_custom_call.1} parent=39 // pred_check
        %p352 = pneg %p121
      $region50: #{tpu_custom_call.1} parent=39 // pred_check_branch
        %354 = sbr.rel (%p352) target = $region52
      $region51: #{tpu_custom_call.1} parent=39 // pred_region
        %s355 = smul.u32 %s23, 4
        %s356 = sadd.s32 %s355, 4
        %p357 = scmp.lt.s32.totalorder %s356, 15
        %s358 = scalar_select %p357, %s356, 15
        %p359 = scmp.lt.s32.totalorder %s22, 1
        %s360 = scalar_select %p359, %s22, 1
        %p361 = scmp.lt.s32.totalorder %s358, 15
        %s362 = scalar_select %p361, %s358, 15
        %s363 = smul.addr %s362, 2
        %s364 = smul.addr %s360, 32
        %s365 = sadd.s32 %s363, %s364
        %s366 = smul.addr %s365, 8
        %s367 = scalar_lea.vmem %s2, %s366
        %s368 = smul.u32 %s23, 4
        %s369 = sadd.s32 %s368, 4
        %p370 = scmp.lt.s32.totalorder %s369, 15
        %s371 = scalar_select %p370, %s369, 15
      $region52: #{tpu_custom_call.1} parent=39 // pred_fallthru
        _
    $region40: #{tpu_custom_call.1} parent=5 // pred_fallthru
      _
    %p372 = scmp.le.s32.totalorder 1, %s15
    %p373 = scmp.lt.s32.totalorder %s15, 9
    %p374 = pnand %p372, %p373
    %p375 = pneg %p374
    // Predicated region
    $region53: #{tpu_custom_call.1} parent=5 // pred_check
      _
    $region54: #{tpu_custom_call.1} parent=5 // pred_check_branch
      %377 = sbr.rel (%p374) target = $region56
    $region55: #{tpu_custom_call.1} parent=5 // pred_region
      %s378 = ssub.s32 %s15, 1
      %s379 = smul.u32 4, %s25
      %p380 = scmp.lt.s32.totalorder %s24, 1
      %s381 = scalar_select %p380, %s24, 1
      %p382 = scmp.lt.s32.totalorder %s379, 15
      %s383 = scalar_select %p382, %s379, 15
      %s384 = smul.addr %s383, 2
      %s385 = smul.addr %s381, 32
      %s386 = sadd.s32 %s384, %s385
      %s387 = smul.addr %s386, 8
      %s388 = scalar_lea.vmem %s0, %s387
      %p389 = pneg %p55
      %p390 = pneg %p52
      %s391 = smul.u32 %s25, 4
      %s392 = ssub.s32 %s391, 1
      %p393 = scmp.gt.s32.totalorder %s392, 0
      %s394 = scalar_select %p393, %s392, 0
      %p395 = scmp.lt.s32.totalorder %s24, 1
      %s396 = scalar_select %p395, %s24, 1
      %p397 = scmp.lt.s32.totalorder %s394, 15
      %s398 = scalar_select %p397, %s394, 15
      %s399 = smul.addr %s398, 2
      %s400 = smul.addr %s396, 32
      %s401 = sadd.s32 %s399, %s400
      %s402 = smul.addr %s401, 8
      %s403 = scalar_lea.vmem %s1, %s402
      %p404 = pneg %p91
      %p405 = pneg %p88
      %s406 = smul.u32 %s25, 4
      %s407 = sadd.s32 %s406, 4
      %p408 = scmp.lt.s32.totalorder %s407, 15
      %s409 = scalar_select %p408, %s407, 15
      %p410 = scmp.lt.s32.totalorder %s24, 1
      %s411 = scalar_select %p410, %s24, 1
      %p412 = scmp.lt.s32.totalorder %s409, 15
      %s413 = scalar_select %p412, %s409, 15
      %s414 = smul.addr %s413, 2
      %s415 = smul.addr %s411, 32
      %s416 = sadd.s32 %s414, %s415
      %s417 = smul.addr %s416, 8
      %s418 = scalar_lea.vmem %s2, %s417
      %p419 = pneg %p127
      %p420 = pneg %p124
      %p421 = pneg %p148
      %p422 = pneg %p145
      %p423 = pneg %p169
      %p424 = pneg %p166
      %p425 = pneg %p190
      %p426 = pneg %p187
      %p427 = pneg %p211
      %p428 = pneg %p208
      %p429 = pneg %p232
      %p430 = pneg %p229
      %p431 = pneg %p253
      %p432 = pneg %p250
      %p433 = pneg %p281
      %p434 = pneg %p278
      %s435 = smul.u32 4, %s25
      %p436 = scmp.lt.s32.totalorder %s24, 1
      %s437 = scalar_select %p436, %s24, 1
      %p438 = scmp.lt.s32.totalorder %s435, 15
      %s439 = scalar_select %p438, %s435, 15
      %s440 = smul.addr %s439, 2
      %s441 = smul.addr %s437, 32
      %s442 = sadd.s32 %s440, %s441
      %s443 = smul.addr %s442, 8
      %s444 = scalar_lea.vmem %s9, %s443
      %s445 = smul.u32 4, %s25
      %p446 = scmp.lt.s32.totalorder %s24, 1
      %s447 = scalar_select %p446, %s24, 1
      %p448 = scmp.lt.s32.totalorder %s445, 15
      %s449 = scalar_select %p448, %s445, 15
      %s450 = smul.addr %s449, 2
      %s451 = smul.addr %s447, 32
      %s452 = sadd.s32 %s450, %s451
      %s453 = smul.addr %s452, 8
      %s454 = scalar_lea.vmem %s0, %s453
      %s455 = smul.u32 4, %s25
      %s456 = smul.u32 %s25, 4
      %s457 = ssub.s32 %s456, 1
      %p458 = scmp.gt.s32.totalorder %s457, 0
      %s459 = scalar_select %p458, %s457, 0
      %p460 = scmp.lt.s32.totalorder %s24, 1
      %s461 = scalar_select %p460, %s24, 1
      %p462 = scmp.lt.s32.totalorder %s459, 15
      %s463 = scalar_select %p462, %s459, 15
      %s464 = smul.addr %s463, 2
      %s465 = smul.addr %s461, 32
      %s466 = sadd.s32 %s464, %s465
      %s467 = smul.addr %s466, 8
      %s468 = scalar_lea.vmem %s1, %s467
      %s469 = smul.u32 %s25, 4
      %s470 = ssub.s32 %s469, 1
      %p471 = scmp.gt.s32.totalorder %s470, 0
      %s472 = scalar_select %p471, %s470, 0
      %s473 = smul.u32 %s25, 4
      %s474 = sadd.s32 %s473, 4
      %p475 = scmp.lt.s32.totalorder %s474, 15
      %s476 = scalar_select %p475, %s474, 15
      %p477 = scmp.lt.s32.totalorder %s24, 1
      %s478 = scalar_select %p477, %s24, 1
      %p479 = scmp.lt.s32.totalorder %s476, 15
      %s480 = scalar_select %p479, %s476, 15
      %s481 = smul.addr %s480, 2
      %s482 = smul.addr %s478, 32
      %s483 = sadd.s32 %s481, %s482
      %s484 = smul.addr %s483, 8
      %s485 = scalar_lea.vmem %s2, %s484
      %s486 = smul.u32 %s25, 4
      %s487 = sadd.s32 %s486, 4
      %p488 = scmp.lt.s32.totalorder %s487, 15
      %s489 = scalar_select %p488, %s487, 15
      %s490 = smul.u32 4, %s25
      %p491 = scmp.lt.s32.totalorder %s24, 1
      %s492 = scalar_select %p491, %s24, 1
      %p493 = scmp.lt.s32.totalorder %s490, 15
      %s494 = scalar_select %p493, %s490, 15
      %s495 = smul.addr %s494, 2
      %s496 = smul.addr %s492, 32
      %s497 = sadd.s32 %s495, %s496
      %s498 = smul.addr %s497, 8
      %s499 = scalar_lea.vmem %s9, %s498
      %s500 = smul.u32 4, %s25
      %p502 = scmp.gt.s32.totalorder %s25, 0
      %s503 = scalar_select %p502, 1, 0
      %s504 = scvt.s32.f32 %s503
      %p505 = scmp.lt.s32.totalorder %s25, 3
      %s506 = scalar_select %p505, 1, 0
      %s507 = scvt.s32.f32 %s506
      %v508 = vld [vmem:[%s468] sm:$0xff]
      %v509 = vld [vmem:[%s468 + $0x8] sm:$0xff]
      %v510 = vstv %s504
      %v511 = vmul.f32 %v508, %v510
      %v512 = vmul.f32 %v509, %v510
      %v513 = vld [vmem:[%s485] sm:$0xff]
      %v514 = vld [vmem:[%s485 + $0x8] sm:$0xff]
      %v515 = vstv %s507
      %v516 = vmul.f32 %v513, %v515
      %v517 = vmul.f32 %v514, %v515
      %v518 = vld [vmem:[%s454] sm:$0xff]
      %v519 = vld [vmem:[%s454 + $0x8] sm:$0xff]
      %v520 = vld [vmem:[%s454 + $0x10] sm:$0xff]
      %v521 = vld [vmem:[%s454 + $0x18] sm:$0xff]
      %v522 = vld [vmem:[%s454 + $0x20] sm:$0xff]
      %v523 = vld [vmem:[%s454 + $0x28] sm:$0xff]
      %v524 = vld [vmem:[%s454 + $0x30] sm:$0xff]
      %v525 = vld [vmem:[%s454 + $0x38] sm:$0xff]
      %v526 = vpack.c.bf16 %v512, %v511
      %v527 = vpack.c.bf16 %v519, %v518
      %v528 = vpack.c.bf16 %v521, %v520
      %v529 = vpack.c.bf16 %v523, %v522
      %v530 = vpack.c.bf16 %v525, %v524
      %v531 = vpack.c.bf16 %v517, %v516
      %v532 = vld [vmem:[%s3] sm:$0x3]
      %vm533 = vcmask 31744
      %v535 = vsel %vm533, %v526, 0
      %v538 = vsel %vm533, %v527, 0
      %v541 = vsel %vm533, %v528, 0
      %v544 = vsel %vm533, %v529, 0
      %v547 = vsel %vm533, %v530, 0
      %v550 = vsel %vm533, %v531, 0
      %vm552 = vcmask 1041408
      %v554 = vsel %vm552, %v532, 0
      %556 = vmatprep.subr.bf16.mxu0 0
      %557 = vmatpush1.bf16.msra.mxu0 %v554
      %558 = vmatprep.subr.bf16.mxu0 0
      %559 = vmatpush1.bf16.msra.mxu0 0
      %560 = vmatprep.subr.bf16.mxu0 0
      %561 = vmatpush1.bf16.msra.mxu0 0
      %562 = vmatprep.subr.bf16.mxu0 0
      %563 = vmatpush1.bf16.msra.mxu0 0
      %564 = vmatprep.subr.bf16.mxu0 0
      %565 = vmatpush1.bf16.msra.mxu0 0
      %566 = vmatprep.subr.bf16.mxu0 0
      %567 = vmatpush1.bf16.msra.mxu0 0
      %568 = vmatprep.subr.bf16.mxu0 0
      %569 = vmatpush1.bf16.msra.mxu0 0
      %570 = vmatprep.subr.bf16.mxu0 0
      %571 = vmatpush1.bf16.msra.mxu0 0
      %572 = vmatprep.subr.bf16.mxu0 0
      %573 = vmatpush1.bf16.msra.mxu0 0
      %574 = vmatprep.subr.bf16.mxu0 0
      %575 = vmatpush1.bf16.msra.mxu0 0
      %576 = vmatprep.subr.bf16.mxu0 0
      %577 = vmatpush1.bf16.msra.mxu0 0
      %578 = vmatprep.subr.bf16.mxu0 0
      %579 = vmatpush1.bf16.msra.mxu0 0
      %580 = vmatprep.subr.bf16.mxu0 0
      %581 = vmatpush1.bf16.msra.mxu0 0
      %582 = vmatprep.subr.bf16.mxu0 0
      %583 = vmatpush1.bf16.msra.mxu0 0
      %584 = vmatprep.subr.bf16.mxu0 0
      %585 = vmatpush1.bf16.msra.mxu0 0
      %586 = vmatprep.subr.bf16.mxu0 0
      %587 = vmatpush1.bf16.msra.mxu0 0
      %588 = vmatprep.mubr.bf16.mxu0 0
      %589 = vmatmul.mubr.bf16.gmra.mrb[0].mxu0 %v535
      %v590 = vpop.f32.mrb[0].mxu0
      %v591 = vadd.f32 0.0, %v590
      %v592 = vpop.f32.mrb[0].mxu0
      %v593 = vpop.f32.mrb[0].mxu0
      %v594 = vadd.f32 0.0, %v593
      %v595 = vpop.f32.mrb[0].mxu0
      %596 = vmatprep.mubr.bf16.mxu0 0
      %597 = vmatmul.mubr.bf16.gmra.mrb[0].mxu0 %v538
      %v598 = vpop.f32.mrb[0].mxu0
      %v599 = vadd.f32 0.0, %v598
      %v600 = vpop.f32.mrb[0].mxu0
      %v601 = vpop.f32.mrb[0].mxu0
      %v602 = vadd.f32 0.0, %v601
      %v603 = vpop.f32.mrb[0].mxu0
      %604 = vmatprep.mubr.bf16.mxu0 0
      %605 = vmatmul.mubr.bf16.gmra.mrb[0].mxu0 %v541
      %v606 = vpop.f32.mrb[0].mxu0
      %v607 = vadd.f32 0.0, %v606
      %v608 = vpop.f32.mrb[0].mxu0
      %v609 = vpop.f32.mrb[0].mxu0
      %v610 = vadd.f32 0.0, %v609
      %v611 = vpop.f32.mrb[0].mxu0
      %612 = vmatprep.mubr.bf16.mxu0 0
      %613 = vmatmul.mubr.bf16.gmra.mrb[0].mxu0 %v544
      %v614 = vpop.f32.mrb[0].mxu0
      %v615 = vadd.f32 0.0, %v614
      %v616 = vpop.f32.mrb[0].mxu0
      %v617 = vpop.f32.mrb[0].mxu0
      %v618 = vadd.f32 0.0, %v617
      %v619 = vpop.f32.mrb[0].mxu0
      %620 = vmatprep.mubr.bf16.mxu0 0
      %621 = vmatmul.mubr.bf16.gmra.mrb[0].mxu0 %v547
      %v622 = vpop.f32.mrb[0].mxu0
      %v623 = vadd.f32 0.0, %v622
      %v624 = vpop.f32.mrb[0].mxu0
      %v625 = vpop.f32.mrb[0].mxu0
      %v626 = vadd.f32 0.0, %v625
      %v627 = vpop.f32.mrb[0].mxu0
      %628 = vmatprep.mubr.bf16.mxu0 0
      %629 = vmatmul.mubr.bf16.gmra.mrb[0].mxu0 %v550
      %v630 = vpop.f32.mrb[0].mxu0
      %v631 = vadd.f32 0.0, %v630
      %v632 = vpop.f32.mrb[0].mxu0
      %v633 = vpop.f32.mrb[0].mxu0
      %v634 = vadd.f32 0.0, %v633
      %v635 = vpop.f32.mrb[0].mxu0
      %636 = vdwg.mxu0
      %v637 = vld [vmem:[%s4] sm:$0x1]
      %639 = vset.pattern.permute.xlu0 0
      %640 = vperm.xlu0 %639, %v510
      %v641 = vpop.permute.xlu0 %640
      %644 = vset.pattern.permute.xlu0 0
      %645 = vperm.xlu0 %644, 1.0
      %v646 = vpop.permute.xlu0 %645
      %649 = vset.pattern.permute.xlu0 0
      %650 = vperm.xlu0 %649, %v515
      %v651 = vpop.permute.xlu0 %650
      %v653 = vmul.f32 %v637, %v641
      %v654 = vmul.f32 %v637, %v646
      %v655 = vmul.f32 %v637, %v651
      %v659 = vlaneseq
      %v660 = vshrl.u32 %v659, 7
      %v661 = vsub.s32 0, %v660
      %v662 = vrot.slane %v653, %v661
      %v663 = vlaneseq
      %v664 = vshrl.u32 %v663, 7
      %v665 = vsub.s32 0, %v664
      %v666 = vrot.slane %v654, %v665
      %v667 = vlaneseq
      %v668 = vshrl.u32 %v667, 7
      %v669 = vsub.s32 0, %v668
      %v670 = vrot.slane %v655, %v669
      %v674 = vadd.f32 %v591, %v662
      %v675 = vadd.f32 %v594, %v662
      %v676 = vadd.f32 %v599, %v666
      %v677 = vadd.f32 %v602, %v666
      %v678 = vadd.f32 %v607, %v666
      %v679 = vadd.f32 %v610, %v666
      %v680 = vadd.f32 %v615, %v666
      %v681 = vadd.f32 %v618, %v666
      %v682 = vadd.f32 %v623, %v666
      %v683 = vadd.f32 %v626, %v666
      %v684 = vadd.f32 %v631, %v670
      %v685 = vadd.f32 %v634, %v670
      %v686 = vld [vmem:[%s6] sm:$0x1]
      %v688 = vlaneseq
      %v689 = vshrl.u32 %v688, 7
      %v690 = vsub.s32 0, %v689
      %v691 = vrot.slane %v686, %v690
      %vm705 = vcmask 1040384
      %v706 = vrot.slane %v674, 7
      %v707 = vrot.slane %v675, 7
      %v708 = vsel %vm705, %v706, %v707
      %v709 = vrot.slane %v676, 7
      %v710 = vrot.slane %v677, 7
      %v711 = vsel %vm705, %v709, %v710
      %v712 = vrot.slane %v678, 7
      %v713 = vrot.slane %v679, 7
      %v714 = vsel %vm705, %v712, %v713
      %v715 = vrot.slane %v680, 7
      %v716 = vrot.slane %v681, 7
      %v717 = vsel %vm705, %v715, %v716
      %v718 = vrot.slane %v682, 7
      %v719 = vrot.slane %v683, 7
      %v720 = vsel %vm705, %v718, %v719
      %v721 = vrot.slane %v684, 7
      %v722 = vrot.slane %v685, 7
      %v723 = vsel %vm705, %v721, %v722
      %v742 = vsel %vm705, 0.0, %v706
      %v743 = vsel %vm705, 0.0, %v709
      %v744 = vsel %vm705, 0.0, %v712
      %v745 = vsel %vm705, 0.0, %v715
      %v746 = vsel %vm705, 0.0, %v718
      %v747 = vsel %vm705, 0.0, %v721
      %v748 = vsel %vm705, %v707, 0.0
      %v749 = vsel %vm705, %v710, 0.0
      %v750 = vsel %vm705, %v713, 0.0
      %v751 = vsel %vm705, %v716, 0.0
      %v752 = vsel %vm705, %v719, 0.0
      %v753 = vsel %vm705, %v722, 0.0
      %v754 = vld [vmem:[%s5] sm:$0x1]
      %v755 = vlaneseq
      %v756 = vshrl.u32 %v755, 7
      %v757 = vsub.s32 0, %v756
      %v758 = vrot.slane %v754, %v757
      %v759 = vmul.f32 %v742, %v758
      %v760 = vmul.f32 %v708, %v758
      %v761 = vmul.f32 %v743, %v758
      %v762 = vmul.f32 %v711, %v758
      %v763 = vmul.f32 %v744, %v758
      %v764 = vmul.f32 %v714, %v758
      %v765 = vmul.f32 %v745, %v758
      %v766 = vmul.f32 %v717, %v758
      %v767 = vadd.f32 %v691, %v759
      %v768 = vadd.f32 %v691, %v760
      %v769 = vadd.f32 %v691, %v761
      %v770 = vadd.f32 %v691, %v762
      %v771 = vadd.f32 %v691, %v763
      %v772 = vadd.f32 %v691, %v764
      %v773 = vadd.f32 %v691, %v765
      %v774 = vadd.f32 %v691, %v766
      %v775 = vld [vmem:[%s5 + $0x1] sm:$0x1]
      %v776 = vlaneseq
      %v777 = vshrl.u32 %v776, 7
      %v778 = vsub.s32 0, %v777
      %v779 = vrot.slane %v775, %v778
      %v780 = vmul.f32 %v742, %v779
      %v781 = vmul.f32 %v708, %v779
      %v782 = vmul.f32 %v748, %v779
      %v783 = vmul.f32 %v743, %v779
      %v784 = vmul.f32 %v711, %v779
      %v785 = vmul.f32 %v749, %v779
      %v786 = vmul.f32 %v744, %v779
      %v787 = vmul.f32 %v714, %v779
      %v788 = vmul.f32 %v750, %v779
      %v789 = vmul.f32 %v745, %v779
      %v790 = vmul.f32 %v717, %v779
      %v791 = vmul.f32 %v751, %v779
      %vm804 = vcmask 1046528
      %v805 = vrot.slane %v780, 1
      %v806 = vrot.slane %v781, 1
      %v807 = vsel %vm804, %v805, %v806
      %v808 = vrot.slane %v782, 1
      %v809 = vsel %vm804, %v806, %v808
      %v810 = vrot.slane %v783, 1
      %v811 = vrot.slane %v784, 1
      %v812 = vsel %vm804, %v810, %v811
      %v813 = vrot.slane %v785, 1
      %v814 = vsel %vm804, %v811, %v813
      %v815 = vrot.slane %v786, 1
      %v816 = vrot.slane %v787, 1
      %v817 = vsel %vm804, %v815, %v816
      %v818 = vrot.slane %v788, 1
      %v819 = vsel %vm804, %v816, %v818
      %v820 = vrot.slane %v789, 1
      %v821 = vrot.slane %v790, 1
      %v822 = vsel %vm804, %v820, %v821
      %v823 = vrot.slane %v791, 1
      %v824 = vsel %vm804, %v821, %v823
      %v833 = vadd.f32 %v767, %v807
      %v834 = vadd.f32 %v768, %v809
      %v835 = vadd.f32 %v769, %v812
      %v836 = vadd.f32 %v770, %v814
      %v837 = vadd.f32 %v771, %v817
      %v838 = vadd.f32 %v772, %v819
      %v839 = vadd.f32 %v773, %v822
      %v840 = vadd.f32 %v774, %v824
      %v841 = vld [vmem:[%s5 + $0x2] sm:$0x1]
      %v842 = vlaneseq
      %v843 = vshrl.u32 %v842, 7
      %v844 = vsub.s32 0, %v843
      %v845 = vrot.slane %v841, %v844
      %v846 = vmul.f32 %v742, %v845
      %v847 = vmul.f32 %v708, %v845
      %v848 = vmul.f32 %v748, %v845
      %v849 = vmul.f32 %v743, %v845
      %v850 = vmul.f32 %v711, %v845
      %v851 = vmul.f32 %v749, %v845
      %v852 = vmul.f32 %v744, %v845
      %v853 = vmul.f32 %v714, %v845
      %v854 = vmul.f32 %v750, %v845
      %v855 = vmul.f32 %v745, %v845
      %v856 = vmul.f32 %v717, %v845
      %v857 = vmul.f32 %v751, %v845
      %vm870 = vcmask 1045504
      %v871 = vrot.slane %v846, 2
      %v872 = vrot.slane %v847, 2
      %v873 = vsel %vm870, %v871, %v872
      %v874 = vrot.slane %v848, 2
      %v875 = vsel %vm870, %v872, %v874
      %v876 = vrot.slane %v849, 2
      %v877 = vrot.slane %v850, 2
      %v878 = vsel %vm870, %v876, %v877
      %v879 = vrot.slane %v851, 2
      %v880 = vsel %vm870, %v877, %v879
      %v881 = vrot.slane %v852, 2
      %v882 = vrot.slane %v853, 2
      %v883 = vsel %vm870, %v881, %v882
      %v884 = vrot.slane %v854, 2
      %v885 = vsel %vm870, %v882, %v884
      %v886 = vrot.slane %v855, 2
      %v887 = vrot.slane %v856, 2
      %v888 = vsel %vm870, %v886, %v887
      %v889 = vrot.slane %v857, 2
      %v890 = vsel %vm870, %v887, %v889
      %v899 = vadd.f32 %v833, %v873
      %v900 = vadd.f32 %v834, %v875
      %v901 = vadd.f32 %v835, %v878
      %v902 = vadd.f32 %v836, %v880
      %v903 = vadd.f32 %v837, %v883
      %v904 = vadd.f32 %v838, %v885
      %v905 = vadd.f32 %v839, %v888
      %v906 = vadd.f32 %v840, %v890
      %s907 = scalar_lea.vmem %s5, 4
      %v908 = vld [vmem:[%s907] sm:$0x1]
      %v909 = vlaneseq
      %v910 = vshrl.u32 %v909, 7
      %v911 = vsub.s32 0, %v910
      %v912 = vrot.slane %v908, %v911
      %v913 = vmul.f32 %v743, %v912
      %v914 = vmul.f32 %v711, %v912
      %v915 = vmul.f32 %v744, %v912
      %v916 = vmul.f32 %v714, %v912
      %v917 = vmul.f32 %v745, %v912
      %v918 = vmul.f32 %v717, %v912
      %v919 = vmul.f32 %v746, %v912
      %v920 = vmul.f32 %v720, %v912
      %v921 = vadd.f32 %v899, %v913
      %v922 = vadd.f32 %v900, %v914
      %v923 = vadd.f32 %v901, %v915
      %v924 = vadd.f32 %v902, %v916
      %v925 = vadd.f32 %v903, %v917
      %v926 = vadd.f32 %v904, %v918
      %v927 = vadd.f32 %v905, %v919
      %v928 = vadd.f32 %v906, %v920
      %v929 = vld [vmem:[%s907 + $0x1] sm:$0x1]
      %v930 = vlaneseq
      %v931 = vshrl.u32 %v930, 7
      %v932 = vsub.s32 0, %v931
      %v933 = vrot.slane %v929, %v932
      %v934 = vmul.f32 %v743, %v933
      %v935 = vmul.f32 %v711, %v933
      %v936 = vmul.f32 %v749, %v933
      %v937 = vmul.f32 %v744, %v933
      %v938 = vmul.f32 %v714, %v933
      %v939 = vmul.f32 %v750, %v933
      %v940 = vmul.f32 %v745, %v933
      %v941 = vmul.f32 %v717, %v933
      %v942 = vmul.f32 %v751, %v933
      %v943 = vmul.f32 %v746, %v933
      %v944 = vmul.f32 %v720, %v933
      %v945 = vmul.f32 %v752, %v933
      %v958 = vrot.slane %v934, 1
      %v959 = vrot.slane %v935, 1
      %v960 = vsel %vm804, %v958, %v959
      %v961 = vrot.slane %v936, 1
      %v962 = vsel %vm804, %v959, %v961
      %v963 = vrot.slane %v937, 1
      %v964 = vrot.slane %v938, 1
      %v965 = vsel %vm804, %v963, %v964
      %v966 = vrot.slane %v939, 1
      %v967 = vsel %vm804, %v964, %v966
      %v968 = vrot.slane %v940, 1
      %v969 = vrot.slane %v941, 1
      %v970 = vsel %vm804, %v968, %v969
      %v971 = vrot.slane %v942, 1
      %v972 = vsel %vm804, %v969, %v971
      %v973 = vrot.slane %v943, 1
      %v974 = vrot.slane %v944, 1
      %v975 = vsel %vm804, %v973, %v974
      %v976 = vrot.slane %v945, 1
      %v977 = vsel %vm804, %v974, %v976
      %v986 = vadd.f32 %v921, %v960
      %v987 = vadd.f32 %v922, %v962
      %v988 = vadd.f32 %v923, %v965
      %v989 = vadd.f32 %v924, %v967
      %v990 = vadd.f32 %v925, %v970
      %v991 = vadd.f32 %v926, %v972
      %v992 = vadd.f32 %v927, %v975
      %v993 = vadd.f32 %v928, %v977
      %v994 = vld [vmem:[%s907 + $0x2] sm:$0x1]
      %v995 = vlaneseq
      %v996 = vshrl.u32 %v995, 7
      %v997 = vsub.s32 0, %v996
      %v998 = vrot.slane %v994, %v997
      %v999 = vmul.f32 %v743, %v998
      %v1000 = vmul.f32 %v711, %v998
      %v1001 = vmul.f32 %v749, %v998
      %v1002 = vmul.f32 %v744, %v998
      %v1003 = vmul.f32 %v714, %v998
      %v1004 = vmul.f32 %v750, %v998
      %v1005 = vmul.f32 %v745, %v998
      %v1006 = vmul.f32 %v717, %v998
      %v1007 = vmul.f32 %v751, %v998
      %v1008 = vmul.f32 %v746, %v998
      %v1009 = vmul.f32 %v720, %v998
      %v1010 = vmul.f32 %v752, %v998
      %v1023 = vrot.slane %v999, 2
      %v1024 = vrot.slane %v1000, 2
      %v1025 = vsel %vm870, %v1023, %v1024
      %v1026 = vrot.slane %v1001, 2
      %v1027 = vsel %vm870, %v1024, %v1026
      %v1028 = vrot.slane %v1002, 2
      %v1029 = vrot.slane %v1003, 2
      %v1030 = vsel %vm870, %v1028, %v1029
      %v1031 = vrot.slane %v1004, 2
      %v1032 = vsel %vm870, %v1029, %v1031
      %v1033 = vrot.slane %v1005, 2
      %v1034 = vrot.slane %v1006, 2
      %v1035 = vsel %vm870, %v1033, %v1034
      %v1036 = vrot.slane %v1007, 2
      %v1037 = vsel %vm870, %v1034, %v1036
      %v1038 = vrot.slane %v1008, 2
      %v1039 = vrot.slane %v1009, 2
      %v1040 = vsel %vm870, %v1038, %v1039
      %v1041 = vrot.slane %v1010, 2
      %v1042 = vsel %vm870, %v1039, %v1041
      %v1051 = vadd.f32 %v986, %v1025
      %v1052 = vadd.f32 %v987, %v1027
      %v1053 = vadd.f32 %v988, %v1030
      %v1054 = vadd.f32 %v989, %v1032
      %v1055 = vadd.f32 %v990, %v1035
      %v1056 = vadd.f32 %v991, %v1037
      %v1057 = vadd.f32 %v992, %v1040
      %v1058 = vadd.f32 %v993, %v1042
      %s1059 = scalar_lea.vmem %s5, 8
      %v1060 = vld [vmem:[%s1059] sm:$0x1]
      %v1061 = vlaneseq
      %v1062 = vshrl.u32 %v1061, 7
      %v1063 = vsub.s32 0, %v1062
      %v1064 = vrot.slane %v1060, %v1063
      %v1065 = vmul.f32 %v744, %v1064
      %v1066 = vmul.f32 %v714, %v1064
      %v1067 = vmul.f32 %v745, %v1064
      %v1068 = vmul.f32 %v717, %v1064
      %v1069 = vmul.f32 %v746, %v1064
      %v1070 = vmul.f32 %v720, %v1064
      %v1071 = vmul.f32 %v747, %v1064
      %v1072 = vmul.f32 %v723, %v1064
      %v1073 = vadd.f32 %v1051, %v1065
      %v1074 = vadd.f32 %v1052, %v1066
      %v1075 = vadd.f32 %v1053, %v1067
      %v1076 = vadd.f32 %v1054, %v1068
      %v1077 = vadd.f32 %v1055, %v1069
      %v1078 = vadd.f32 %v1056, %v1070
      %v1079 = vadd.f32 %v1057, %v1071
      %v1080 = vadd.f32 %v1058, %v1072
      %v1081 = vld [vmem:[%s1059 + $0x1] sm:$0x1]
      %v1082 = vlaneseq
      %v1083 = vshrl.u32 %v1082, 7
      %v1084 = vsub.s32 0, %v1083
      %v1085 = vrot.slane %v1081, %v1084
      %v1086 = vmul.f32 %v744, %v1085
      %v1087 = vmul.f32 %v714, %v1085
      %v1088 = vmul.f32 %v750, %v1085
      %v1089 = vmul.f32 %v745, %v1085
      %v1090 = vmul.f32 %v717, %v1085
      %v1091 = vmul.f32 %v751, %v1085
      %v1092 = vmul.f32 %v746, %v1085
      %v1093 = vmul.f32 %v720, %v1085
      %v1094 = vmul.f32 %v752, %v1085
      %v1095 = vmul.f32 %v747, %v1085
      %v1096 = vmul.f32 %v723, %v1085
      %v1097 = vmul.f32 %v753, %v1085
      %v1110 = vrot.slane %v1086, 1
      %v1111 = vrot.slane %v1087, 1
      %v1112 = vsel %vm804, %v1110, %v1111
      %v1113 = vrot.slane %v1088, 1
      %v1114 = vsel %vm804, %v1111, %v1113
      %v1115 = vrot.slane %v1089, 1
      %v1116 = vrot.slane %v1090, 1
      %v1117 = vsel %vm804, %v1115, %v1116
      %v1118 = vrot.slane %v1091, 1
      %v1119 = vsel %vm804, %v1116, %v1118
      %v1120 = vrot.slane %v1092, 1
      %v1121 = vrot.slane %v1093, 1
      %v1122 = vsel %vm804, %v1120, %v1121
      %v1123 = vrot.slane %v1094, 1
      %v1124 = vsel %vm804, %v1121, %v1123
      %v1125 = vrot.slane %v1095, 1
      %v1126 = vrot.slane %v1096, 1
      %v1127 = vsel %vm804, %v1125, %v1126
      %v1128 = vrot.slane %v1097, 1
      %v1129 = vsel %vm804, %v1126, %v1128
      %v1138 = vadd.f32 %v1073, %v1112
      %v1139 = vadd.f32 %v1074, %v1114
      %v1140 = vadd.f32 %v1075, %v1117
      %v1141 = vadd.f32 %v1076, %v1119
      %v1142 = vadd.f32 %v1077, %v1122
      %v1143 = vadd.f32 %v1078, %v1124
      %v1144 = vadd.f32 %v1079, %v1127
      %v1145 = vadd.f32 %v1080, %v1129
      %v1146 = vld [vmem:[%s1059 + $0x2] sm:$0x1]
      %v1147 = vlaneseq
      %v1148 = vshrl.u32 %v1147, 7
      %v1149 = vsub.s32 0, %v1148
      %v1150 = vrot.slane %v1146, %v1149
      %v1151 = vmul.f32 %v744, %v1150
      %v1152 = vmul.f32 %v714, %v1150
      %v1153 = vmul.f32 %v750, %v1150
      %v1154 = vmul.f32 %v745, %v1150
      %v1155 = vmul.f32 %v717, %v1150
      %v1156 = vmul.f32 %v751, %v1150
      %v1157 = vmul.f32 %v746, %v1150
      %v1158 = vmul.f32 %v720, %v1150
      %v1159 = vmul.f32 %v752, %v1150
      %v1160 = vmul.f32 %v747, %v1150
      %v1161 = vmul.f32 %v723, %v1150
      %v1162 = vmul.f32 %v753, %v1150
      %v1175 = vrot.slane %v1151, 2
      %v1176 = vrot.slane %v1152, 2
      %v1177 = vsel %vm870, %v1175, %v1176
      %v1178 = vrot.slane %v1153, 2
      %v1179 = vsel %vm870, %v1176, %v1178
      %v1180 = vrot.slane %v1154, 2
      %v1181 = vrot.slane %v1155, 2
      %v1182 = vsel %vm870, %v1180, %v1181
      %v1183 = vrot.slane %v1156, 2
      %v1184 = vsel %vm870, %v1181, %v1183
      %v1185 = vrot.slane %v1157, 2
      %v1186 = vrot.slane %v1158, 2
      %v1187 = vsel %vm870, %v1185, %v1186
      %v1188 = vrot.slane %v1159, 2
      %v1189 = vsel %vm870, %v1186, %v1188
      %v1190 = vrot.slane %v1160, 2
      %v1191 = vrot.slane %v1161, 2
      %v1192 = vsel %vm870, %v1190, %v1191
      %v1193 = vrot.slane %v1162, 2
      %v1194 = vsel %vm870, %v1191, %v1193
      %v1203 = vadd.f32 %v1138, %v1177
      %v1204 = vadd.f32 %v1139, %v1179
      %v1205 = vadd.f32 %v1140, %v1182
      %v1206 = vadd.f32 %v1141, %v1184
      %v1207 = vadd.f32 %v1142, %v1187
      %v1208 = vadd.f32 %v1143, %v1189
      %v1209 = vadd.f32 %v1144, %v1192
      %v1210 = vadd.f32 %v1145, %v1194
      %v1211 = vmul.f32 %v1203, 0.5
      %v1212 = vmul.f32 %v1204, 0.5
      %v1213 = vmul.f32 %v1205, 0.5
      %v1214 = vmul.f32 %v1206, 0.5
      %v1215 = vmul.f32 %v1207, 0.5
      %v1216 = vmul.f32 %v1208, 0.5
      %v1217 = vmul.f32 %v1209, 0.5
      %v1218 = vmul.f32 %v1210, 0.5
      %v1219 = vmul.f32 %v1203, 0.70710677
      %v1220 = vmul.f32 %v1204, 0.70710677
      %v1221 = vmul.f32 %v1205, 0.70710677
      %v1222 = vmul.f32 %v1206, 0.70710677
      %v1223 = vmul.f32 %v1207, 0.70710677
      %v1224 = vmul.f32 %v1208, 0.70710677
      %v1225 = vmul.f32 %v1209, 0.70710677
      %v1226 = vmul.f32 %v1210, 0.70710677
      %v1227 = verf.f32.pop %v1219
      %v1228 = verf.f32.pop %v1220
      %v1229 = verf.f32.pop %v1221
      %v1230 = verf.f32.pop %v1222
      %v1231 = verf.f32.pop %v1223
      %v1232 = verf.f32.pop %v1224
      %v1233 = verf.f32.pop %v1225
      %v1234 = verf.f32.pop %v1226
      %v1235 = vadd.f32 %v1227, 1.0
      %v1236 = vadd.f32 %v1228, 1.0
      %v1237 = vadd.f32 %v1229, 1.0
      %v1238 = vadd.f32 %v1230, 1.0
      %v1239 = vadd.f32 %v1231, 1.0
      %v1240 = vadd.f32 %v1232, 1.0
      %v1241 = vadd.f32 %v1233, 1.0
      %v1242 = vadd.f32 %v1234, 1.0
      %v1243 = vmul.f32 %v1211, %v1235
      %v1244 = vmul.f32 %v1212, %v1236
      %v1245 = vmul.f32 %v1213, %v1237
      %v1246 = vmul.f32 %v1214, %v1238
      %v1247 = vmul.f32 %v1215, %v1239
      %v1248 = vmul.f32 %v1216, %v1240
      %v1249 = vmul.f32 %v1217, %v1241
      %v1250 = vmul.f32 %v1218, %v1242
      %1259 = vrot.lane.b32.xlu0 %v1203, 120
      %v1260 = vpop.permute.xlu0 %1259
      %1261 = vrot.lane.b32.xlu0 %v1204, 120
      %v1262 = vpop.permute.xlu0 %1261
      %1263 = vrot.lane.b32.xlu0 %v1205, 120
      %v1264 = vpop.permute.xlu0 %1263
      %1265 = vrot.lane.b32.xlu0 %v1206, 120
      %v1266 = vpop.permute.xlu0 %1265
      %1267 = vrot.lane.b32.xlu0 %v1207, 120
      %v1268 = vpop.permute.xlu0 %1267
      %1269 = vrot.lane.b32.xlu0 %v1208, 120
      %v1270 = vpop.permute.xlu0 %1269
      %1271 = vrot.lane.b32.xlu0 %v1209, 120
      %v1272 = vpop.permute.xlu0 %1271
      %1273 = vrot.lane.b32.xlu0 %v1210, 120
      %v1274 = vpop.permute.xlu0 %1273
      %v1283 = vmul.f32 %v1243, %v1260
      %v1284 = vmul.f32 %v1244, %v1262
      %v1285 = vmul.f32 %v1245, %v1264
      %v1286 = vmul.f32 %v1246, %v1266
      %v1287 = vmul.f32 %v1247, %v1268
      %v1288 = vmul.f32 %v1248, %v1270
      %v1289 = vmul.f32 %v1249, %v1272
      %v1290 = vmul.f32 %v1250, %v1274
      %v1291 = vpack.c.bf16 %v1284, %v1283
      %v1292 = vpack.c.bf16 %v1286, %v1285
      %v1293 = vpack.c.bf16 %v1288, %v1287
      %v1294 = vpack.c.bf16 %v1290, %v1289
      %v1295 = vld [vmem:[%s7] sm:$0xf]
      %v1296 = vld [vmem:[%s8] sm:$0x1]
      %v1298 = vlaneseq
      %v1299 = vshrl.u32 %v1298, 7
      %v1300 = vsub.s32 0, %v1299
      %v1301 = vrot.slane %v1296, %v1300
      %vm1303 = vcmask 64512
      %v1305 = vsel %vm1303, %v1291, 0
      %v1308 = vsel %vm1303, %v1292, 0
      %v1311 = vsel %vm1303, %v1293, 0
      %v1314 = vsel %vm1303, %v1294, 0
      %vm1316 = vcmask 1043456
      %v1318 = vsel %vm1316, %v1295, 0
      %1320 = vmatprep.subr.bf16.mxu0 0
      %1321 = vmatpush1.bf16.msra.mxu0 %v1318
      %1322 = vmatprep.subr.bf16.mxu0 0
      %1323 = vmatpush1.bf16.msra.mxu0 0
      %1324 = vmatprep.subr.bf16.mxu0 0
      %1325 = vmatpush1.bf16.msra.mxu0 0
      %1326 = vmatprep.subr.bf16.mxu0 0
      %1327 = vmatpush1.bf16.msra.mxu0 0
      %1328 = vmatprep.subr.bf16.mxu0 0
      %1329 = vmatpush1.bf16.msra.mxu0 0
      %1330 = vmatprep.subr.bf16.mxu0 0
      %1331 = vmatpush1.bf16.msra.mxu0 0
      %1332 = vmatprep.subr.bf16.mxu0 0
      %1333 = vmatpush1.bf16.msra.mxu0 0
      %1334 = vmatprep.subr.bf16.mxu0 0
      %1335 = vmatpush1.bf16.msra.mxu0 0
      %1336 = vmatprep.subr.bf16.mxu0 0
      %1337 = vmatpush1.bf16.msra.mxu0 0
      %1338 = vmatprep.subr.bf16.mxu0 0
      %1339 = vmatpush1.bf16.msra.mxu0 0
      %1340 = vmatprep.subr.bf16.mxu0 0
      %1341 = vmatpush1.bf16.msra.mxu0 0
      %1342 = vmatprep.subr.bf16.mxu0 0
      %1343 = vmatpush1.bf16.msra.mxu0 0
      %1344 = vmatprep.subr.bf16.mxu0 0
      %1345 = vmatpush1.bf16.msra.mxu0 0
      %1346 = vmatprep.subr.bf16.mxu0 0
      %1347 = vmatpush1.bf16.msra.mxu0 0
      %1348 = vmatprep.subr.bf16.mxu0 0
      %1349 = vmatpush1.bf16.msra.mxu0 0
      %1350 = vmatprep.subr.bf16.mxu0 0
      %1351 = vmatpush1.bf16.msra.mxu0 0
      %1352 = vmatprep.mubr.bf16.mxu0 0
      %1353 = vmatmul.mubr.bf16.gmra.mrb[0].mxu0 %v1305
      %v1354 = vpop.f32.mrb[0].mxu0
      %v1355 = vadd.f32 %v1301, %v1354
      %v1356 = vpop.f32.mrb[0].mxu0
      %v1357 = vpop.f32.mrb[0].mxu0
      %v1358 = vadd.f32 %v1301, %v1357
      %v1359 = vpop.f32.mrb[0].mxu0
      %1360 = vmatprep.mubr.bf16.mxu0 0
      %1361 = vmatmul.mubr.bf16.gmra.mrb[0].mxu0 %v1308
      %v1362 = vpop.f32.mrb[0].mxu0
      %v1363 = vadd.f32 %v1301, %v1362
      %v1364 = vpop.f32.mrb[0].mxu0
      %v1365 = vpop.f32.mrb[0].mxu0
      %v1366 = vadd.f32 %v1301, %v1365
      %v1367 = vpop.f32.mrb[0].mxu0
      %1368 = vmatprep.mubr.bf16.mxu0 0
      %1369 = vmatmul.mubr.bf16.gmra.mrb[0].mxu0 %v1311
      %v1370 = vpop.f32.mrb[0].mxu0
      %v1371 = vadd.f32 %v1301, %v1370
      %v1372 = vpop.f32.mrb[0].mxu0
      %v1373 = vpop.f32.mrb[0].mxu0
      %v1374 = vadd.f32 %v1301, %v1373
      %v1375 = vpop.f32.mrb[0].mxu0
      %1376 = vmatprep.mubr.bf16.mxu0 0
      %1377 = vmatmul.mubr.bf16.gmra.mrb[0].mxu0 %v1314
      %v1378 = vpop.f32.mrb[0].mxu0
      %v1379 = vadd.f32 %v1301, %v1378
      %v1380 = vpop.f32.mrb[0].mxu0
      %v1381 = vpop.f32.mrb[0].mxu0
      %v1382 = vadd.f32 %v1301, %v1381
      %v1383 = vpop.f32.mrb[0].mxu0
      %1384 = vdwg.mxu0
      %1385 = vst.msk [vmem:[%s499] sm:$0xff] %vm533, %v1355
      %1386 = vst.msk [vmem:[%s499 + $0x8] sm:$0xff] %vm533, %v1358
      %1387 = vst.msk [vmem:[%s499 + $0x10] sm:$0xff] %vm533, %v1363
      %1388 = vst.msk [vmem:[%s499 + $0x18] sm:$0xff] %vm533, %v1366
      %1389 = vst.msk [vmem:[%s499 + $0x20] sm:$0xff] %vm533, %v1371
      %1390 = vst.msk [vmem:[%s499 + $0x28] sm:$0xff] %vm533, %v1374
      %1391 = vst.msk [vmem:[%s499 + $0x30] sm:$0xff] %vm533, %v1379
      %1392 = vst.msk [vmem:[%s499 + $0x38] sm:$0xff] %vm533, %v1382
      %s1393 = smul.u32 4, %s25
      %p1394 = scmp.lt.s32.totalorder %s24, 1
      %s1395 = scalar_select %p1394, %s24, 1
      %p1396 = scmp.lt.s32.totalorder %s1393, 15
      %s1397 = scalar_select %p1396, %s1393, 15
      %s1398 = smul.addr %s1397, 2
      %s1399 = smul.addr %s1395, 32
      %s1400 = sadd.s32 %s1398, %s1399
      %s1401 = smul.addr %s1400, 8
      %s1402 = scalar_lea.vmem %s9, %s1401
      // Predicated region
      $region57: #{tpu_custom_call.1} parent=55 // pred_check
        %p1403 = pneg %p278
      $region58: #{tpu_custom_call.1} parent=55 // pred_check_branch
        %1405 = sbr.rel (%p1403) target = $region60
      $region59: #{tpu_custom_call.1} parent=55 // pred_region
        %s1406 = smul.u32 4, %s25
      $region60: #{tpu_custom_call.1} parent=55 // pred_fallthru
        _
    $region56: #{tpu_custom_call.1} parent=5 // pred_fallthru
      _
    %p1407 = scmp.le.s32.totalorder 2, %s15
    // Predicated region
    $region61: #{tpu_custom_call.1} parent=5 // pred_check
      %p1408 = pneg %p1407
    $region62: #{tpu_custom_call.1} parent=5 // pred_check_branch
      %1410 = sbr.rel (%p1408) target = $region64
    $region63: #{tpu_custom_call.1} parent=5 // pred_region
      %s1411 = ssub.s32 %s15, 2
      // Predicated region
      $region65: #{tpu_custom_call.1} parent=63 // pred_check
        %p1412 = pneg %p284
      $region66: #{tpu_custom_call.1} parent=63 // pred_check_branch
        %1414 = sbr.rel (%p1412) target = $region68
      $region67: #{tpu_custom_call.1} parent=63 // pred_region
        %s1415 = smul.u32 4, %s27
        %p1416 = scmp.lt.s32.totalorder %s26, 1
        %s1417 = scalar_select %p1416, %s26, 1
        %p1418 = scmp.lt.s32.totalorder %s1415, 15
        %s1419 = scalar_select %p1418, %s1415, 15
        %s1420 = smul.addr %s1419, 2
        %s1421 = smul.addr %s1417, 32
        %s1422 = sadd.s32 %s1420, %s1421
        %s1423 = smul.addr %s1422, 8
        %s1424 = scalar_lea.vmem %s9, %s1423
      $region68: #{tpu_custom_call.1} parent=63 // pred_fallthru
        _
    $region64: #{tpu_custom_call.1} parent=5 // pred_fallthru
      _
  $region6: #{tpu_custom_call.1} parent=0 // loop_footer
    %s19 = sadd.s32 1, %s15
  $region7: #{tpu_custom_call.1} parent=0 // loop_footer_branch
    %14 = sbr.rel target = $region3
  $region8: #{tpu_custom_call.1} parent=0 // loop_exit
    _

</llo_original>
